<compile_context>
chip_gen: v7x
topology: tpu7x:2x2x1
jax: 0.10.0
libtpu: 0.0.40
codegen_flags: <defaults>
</compile_context>

<pallas_src>
import jax
import jax.numpy as jnp
from jax.experimental import pallas as pl

# ---- static config (mirrors Decoder / Attention __init__) ----
B = 2              # batch
ISL = 8            # encoder (input) sequence length
INPUT_DIM = 768    # Attention.input_dim
ATTN_HID = 128     # Attention.hidden_dim
EMB_DIM = 50       # decoder embedding dim == Attention.out_dim
HID = 32           # args.decoder.hidden_dim
LAYERS = 2         # args.decoder.layers
VOCAB = 64         # len(vocab_dict) + 1   (synthetic)
NUM_DB = 4         # number of database masks (synthetic)

LANE = 128         # lane width / padded feature dim
KV_OUT = 2 * ATTN_HID   # fused (key|val) projection output, padded to 256
VOCAB_PAD = 128    # vocab padded to a full lane tile


def decoder_step_kernel(ctx_ref, emb_ref, mask_ref, h0_ref, c0_ref, dbm_ref,
                        wkv_ref, wq_ref,
                        wih0a_ref, wih0b_ref, whh0_ref, b0_ref,
                        wih1_ref, whh1_ref, b1_ref,
                        wfc_ref, bfc_ref,
                        probs_ref, hn_ref, cn_ref):
    # ---- Attention: fused key|val projection, one bf16 MXU pass ----
    # ctx_ref: [B*ISL, INPUT_DIM] bf16 ; wkv_ref: [INPUT_DIM, 256] bf16
    kv = jnp.dot(ctx_ref[...], wkv_ref[...],
                 preferred_element_type=jnp.float32)          # [B*ISL, 256] f32
    key = kv[:, :ATTN_HID].reshape(B, ISL, ATTN_HID)          # [B, ISL, 128]
    val = kv[:, ATTN_HID:].reshape(B, ISL, ATTN_HID)          # [B, ISL, 128] (cols>=50 are 0)

    emb = emb_ref[...]                                        # [B, 128] f32 (cols>=50 are 0)
    qry = jnp.dot(emb, wq_ref[...],
                  preferred_element_type=jnp.float32)         # [B, 128]

    # scores on the VPU (multiply + lane reduce) — keeps the MXU free
    scores = jnp.sum(key * qry[:, None, :], axis=-1)          # [B, ISL]
    scores = scores * (1.0 / (ATTN_HID ** 0.5)) + mask_ref[...]
    scores = scores - jnp.max(scores, axis=-1, keepdims=True)
    e = jnp.exp(scores)
    attn = e / jnp.sum(e, axis=-1, keepdims=True)             # [B, ISL]
    attn_out = jnp.sum(val * attn[:, :, None], axis=1)        # [B, 128] (cols>=50 are 0)

    # ---- 2-layer LSTM, single time step (PyTorch gate order i,f,g,o) ----
    def lstm_cell(gates, c):
        # whole-vreg EUP activations, then slice the 32-lane gate windows
        sig = jax.nn.sigmoid(gates)                           # [B, 4*HID]
        th = jnp.tanh(gates)                                  # [B, 4*HID]
        i = sig[:, 0 * HID:1 * HID]
        f = sig[:, 1 * HID:2 * HID]
        g = th[:, 2 * HID:3 * HID]
        o = sig[:, 3 * HID:4 * HID]
        c_new = f * c + i * g
        h_new = o * jnp.tanh(c_new)
        return h_new, c_new

    # layer 0: concat([attn_out, emb]) @ Wih  ==  attn_out@Wih[:50] + emb@Wih[50:100]
    # implemented as two 128-contraction matmuls against zero-row-padded weights.
    gates0 = (jnp.dot(attn_out, wih0a_ref[...], preferred_element_type=jnp.float32)
              + jnp.dot(emb, wih0b_ref[...], preferred_element_type=jnp.float32)
              + jnp.dot(h0_ref[0], whh0_ref[...], preferred_element_type=jnp.float32)
              + b0_ref[...])                                  # [B, 4*HID]
    h1, c1 = lstm_cell(gates0, c0_ref[0])

    gates1 = (jnp.dot(h1, wih1_ref[...], preferred_element_type=jnp.float32)
              + jnp.dot(h0_ref[1], whh1_ref[...], preferred_element_type=jnp.float32)
              + b1_ref[...])                                  # [B, 4*HID]
    h2, c2 = lstm_cell(gates1, c0_ref[1])

    hn_ref[0] = h1
    hn_ref[1] = h2
    cn_ref[0] = c1
    cn_ref[1] = c2

    # ---- fc + db mask + softmax over the padded (lane-dense) vocab ----
    # padded vocab columns carry -1e30 in bfc -> exp() == 0, softmax unaffected.
    logits = (jnp.dot(h2, wfc_ref[...], preferred_element_type=jnp.float32)
              + bfc_ref[...] + dbm_ref[...])                  # [B, 128]
    logits = logits - jnp.max(logits, axis=-1, keepdims=True)
    ez = jnp.exp(logits)
    probs_ref[...] = ez / jnp.sum(ez, axis=-1, keepdims=True)


def _full(shape):
    """Full-array BlockSpec for a grid-less (single program) pallas_call."""
    return pl.BlockSpec(shape, lambda: (0,) * len(shape))


def pack_params(params):
    """One-time packing/padding of the weights into kernel layout."""
    f32 = jnp.float32
    # fused Wk|Wv, columns padded to 256, stored bf16 (HBM-traffic cut)
    wkv = jnp.zeros((INPUT_DIM, KV_OUT), f32)
    wkv = wkv.at[:, :ATTN_HID].set(params['wk'])
    wkv = wkv.at[:, ATTN_HID:ATTN_HID + EMB_DIM].set(params['wv'])
    # Wq padded to 128 contraction rows (matches the lane-padded embedding)
    wq_pad = jnp.zeros((LANE, ATTN_HID), f32).at[:EMB_DIM].set(params['wq'])
    # Wih layer-0 split into (attention-context part, embedding part), each
    # padded to a 128-row contraction
    wih0a = jnp.zeros((LANE, 4 * HID), f32).at[:EMB_DIM].set(params['wih0'][:EMB_DIM])
    wih0b = jnp.zeros((LANE, 4 * HID), f32).at[:EMB_DIM].set(params['wih0'][EMB_DIM:])
    # fc padded to 128 output lanes; padded bias columns = -1e30 so they vanish
    # in the softmax
    wfc_pad = jnp.zeros((HID, VOCAB_PAD), f32).at[:, :VOCAB].set(params['wfc'])
    bfc_pad = jnp.full((1, VOCAB_PAD), -1e30, f32).at[:, :VOCAB].set(params['bfc'][0])
    return dict(
        wkv=wkv.astype(jnp.bfloat16),
        wq=wq_pad,
        wih0a=wih0a, wih0b=wih0b, whh0=params['whh0'], b0=params['b0'],
        wih1=params['wih1'], whh1=params['whh1'], b1=params['b1'],
        wfc=wfc_pad, bfc=bfc_pad,
        emb_table=params['emb_table'],
        db_mask=params['db_mask'],
    )


@jax.jit
def decoder_forward(packed, db_id, prev_output, context_bf16, prev_hidden, mask):
    """Mirror of Decoder.forward (single decode step), whole batch in one program."""
    h0, c0 = prev_hidden

    # glue: embedding lookup + db_mask row gather + lane padding
    emb = packed['emb_table'][prev_output[:, 0]]                       # [B, 50]
    emb128 = jnp.zeros((B, LANE), jnp.float32).at[:, :EMB_DIM].set(emb)
    dbm = packed['db_mask'][db_id]                                     # [B, VOCAB]
    dbm128 = jnp.zeros((B, VOCAB_PAD), jnp.float32).at[:, :VOCAB].set(dbm)
    ctx2d = context_bf16.reshape(B * ISL, INPUT_DIM)                   # [16, 768] bf16

    in_specs = [
        _full((B * ISL, INPUT_DIM)),     # context (bf16)
        _full((B, LANE)),                # padded prev embedding
        _full((B, ISL)),                 # attention mask
        _full((LAYERS, B, HID)),         # h0
        _full((LAYERS, B, HID)),         # c0
        _full((B, VOCAB_PAD)),           # gathered + padded db mask
        _full((INPUT_DIM, KV_OUT)),      # fused Wk|Wv (bf16)
        _full((LANE, ATTN_HID)),         # Wq (row padded)
        _full((LANE, 4 * HID)),          # W_ih l0, attention part (row padded)
        _full((LANE, 4 * HID)),          # W_ih l0, embedding part (row padded)
        _full((HID, 4 * HID)),           # W_hh l0
        _full((1, 4 * HID)),             # b l0 (b_ih + b_hh)
        _full((HID, 4 * HID)),           # W_ih l1
        _full((HID, 4 * HID)),           # W_hh l1
        _full((1, 4 * HID)),             # b l1
        _full((HID, VOCAB_PAD)),         # W_fc (col padded)
        _full((1, VOCAB_PAD)),           # b_fc (padded cols = -1e30)
    ]
    out_specs = (
        _full((B, VOCAB_PAD)),           # probs (lane-dense, sliced outside)
        _full((LAYERS, B, HID)),         # h_next
        _full((LAYERS, B, HID)),         # c_next
    )
    out_shape = (
        jax.ShapeDtypeStruct((B, VOCAB_PAD), jnp.float32),
        jax.ShapeDtypeStruct((LAYERS, B, HID), jnp.float32),
        jax.ShapeDtypeStruct((LAYERS, B, HID), jnp.float32),
    )

    probs_pad, hn, cn = pl.pallas_call(
        decoder_step_kernel,
        out_shape=out_shape,
        in_specs=in_specs,
        out_specs=out_specs,
    )(ctx2d, emb128, mask, h0, c0, dbm128,
      packed['wkv'], packed['wq'],
      packed['wih0a'], packed['wih0b'], packed['whh0'], packed['b0'],
      packed['wih1'], packed['whh1'], packed['b1'],
      packed['wfc'], packed['bfc'])

    probs = probs_pad[:, :VOCAB]
    return probs.reshape(B, 1, VOCAB), (hn, cn)
    # TODO(synk): if called per decode token, hoist the token loop inside one
    # pallas_call (or keep weights resident across calls) to amortize the
    # weight DMA across the sequence.


def reference_forward(params, db_id, prev_output, context, prev_hidden, mask):
    """Pure-JAX reference of Decoder.forward for verification."""
    h0, c0 = prev_hidden
    emb = params['emb_table'][prev_output[:, 0]]                   # [B, 50]
    key = jnp.einsum('bsd,dh->bsh', context, params['wk'])
    qry = jnp.einsum('bd,dh->bh', emb, params['wq'])
    val = jnp.einsum('bsd,dv->bsv', context, params['wv'])
    scores = (key * qry[:, None, :]).sum(-1) / (ATTN_HID ** 0.5) + mask
    a = jax.nn.softmax(scores, axis=-1)[..., None]
    ctx_out = (val * a).sum(1)                                     # [B, 50]
    x = jnp.concatenate([ctx_out, emb], axis=-1)                   # [B, 100]

    def cell(xin, h, c, wih, whh, b):
        g = xin @ wih + h @ whh + b
        i, f, gg, o = jnp.split(g, 4, axis=-1)
        c_new = jax.nn.sigmoid(f) * c + jax.nn.sigmoid(i) * jnp.tanh(gg)
        h_new = jax.nn.sigmoid(o) * jnp.tanh(c_new)
        return h_new, c_new

    h1, c1 = cell(x, h0[0], c0[0], params['wih0'], params['whh0'], params['b0'][0])
    h2, c2 = cell(h1, h0[1], c0[1], params['wih1'], params['whh1'], params['b1'][0])
    logits = h2 @ params['wfc'] + params['bfc'][0] + params['db_mask'][db_id]
    probs = jax.nn.softmax(logits, axis=-1)
    return probs.reshape(B, 1, VOCAB), (jnp.stack([h1, h2]), jnp.stack([c1, c2]))


def init_params(key):
    ks = jax.random.split(key, 16)
    u = lambda k, shape, s=0.1: jax.random.uniform(k, shape, jnp.float32, -s, s)

    emb_table = u(ks[0], (VOCAB, EMB_DIM), 1.0)
    emb_table = emb_table.at[0].set(0.0)                 # padding_idx=0

    # db mask table: blocked entries -> -1e10, allowed -> 0 (mimics generate_masks)
    allowed = (jax.random.uniform(ks[1], (NUM_DB, VOCAB)) > 0.3)
    allowed = allowed.at[:, :2].set(False).at[:, -2:].set(True)
    db_mask = jnp.where(allowed, 0.0, -1e10).astype(jnp.float32)

    return dict(
        emb_table=emb_table,
        db_mask=db_mask,
        wk=u(ks[2], (INPUT_DIM, ATTN_HID)),
        wq=u(ks[3], (EMB_DIM, ATTN_HID)),
        wv=u(ks[4], (INPUT_DIM, EMB_DIM)),
        wih0=u(ks[5], (EMB_DIM * 2, 4 * HID)),
        whh0=u(ks[6], (HID, 4 * HID)),
        b0=u(ks[7], (1, 4 * HID)),
        wih1=u(ks[8], (HID, 4 * HID)),
        whh1=u(ks[9], (HID, 4 * HID)),
        b1=u(ks[10], (1, 4 * HID)),
        wfc=u(ks[11], (HID, VOCAB)),
        bfc=u(ks[12], (1, VOCAB)),
    )


if __name__ == "__main__":
    root = jax.random.PRNGKey(0)
    kp, k1, k2, k3, k4, k5 = jax.random.split(root, 6)
    params = init_params(kp)
    packed = pack_params(params)

    db_id = jax.random.randint(k1, (B,), 0, NUM_DB)
    prev_output = jax.random.randint(k2, (B, 1), 1, VOCAB)
    context_f32 = jax.random.normal(k3, (B, ISL, INPUT_DIM), jnp.float32)
    context = context_f32.astype(jnp.bfloat16)           # bf16 storage / DMA
    h0 = jax.random.normal(k4, (LAYERS, B, HID), jnp.float32) * 0.1
    c0 = jax.random.normal(k5, (LAYERS, B, HID), jnp.float32) * 0.1
    # attention padding mask: 0 for valid, -1e9 for padded positions
    lengths = jnp.array([ISL, ISL - 2])
    mask = jnp.where(jnp.arange(ISL)[None, :] < lengths[:, None], 0.0, -1e9)
    mask = mask.astype(jnp.float32)

    probs, (hn, cn) = decoder_forward(packed, db_id, prev_output, context,
                                      (h0, c0), mask)
    jax.block_until_ready((probs, hn, cn))

    # verify against pure-JAX reference on the identically-rounded operands
    ref_params = dict(params)
    ref_params['wk'] = params['wk'].astype(jnp.bfloat16).astype(jnp.float32)
    ref_params['wv'] = params['wv'].astype(jnp.bfloat16).astype(jnp.float32)
    ctx_ref = context.astype(jnp.float32)
    rprobs, (rhn, rcn) = reference_forward(ref_params, db_id, prev_output,
                                           ctx_ref, (h0, c0), mask)

    assert probs.shape == (B, 1, VOCAB)
    assert hn.shape == (LAYERS, B, HID) and cn.shape == (LAYERS, B, HID)
    assert jnp.allclose(probs, rprobs, atol=5e-5, rtol=5e-5)
    assert jnp.allclose(hn, rhn, atol=5e-5, rtol=5e-5)
    assert jnp.allclose(cn, rcn, atol=5e-5, rtol=5e-5)

    print("KERNEL_OK")
</pallas_src>

<mosaic_0001>
module attributes {stable_mosaic.version = 11 : i64} {
  func.func @decoder_step_kernel(%arg0: memref<16x768xbf16, #tpu.memory_space<vmem>>, %arg1: memref<2x128xf32, #tpu.memory_space<vmem>>, %arg2: memref<2x8xf32, #tpu.memory_space<vmem>>, %arg3: memref<2x2x32xf32, #tpu.memory_space<vmem>>, %arg4: memref<2x2x32xf32, #tpu.memory_space<vmem>>, %arg5: memref<2x128xf32, #tpu.memory_space<vmem>>, %arg6: memref<768x256xbf16, #tpu.memory_space<vmem>>, %arg7: memref<128x128xf32, #tpu.memory_space<vmem>>, %arg8: memref<128x128xf32, #tpu.memory_space<vmem>>, %arg9: memref<128x128xf32, #tpu.memory_space<vmem>>, %arg10: memref<32x128xf32, #tpu.memory_space<vmem>>, %arg11: memref<1x128xf32, #tpu.memory_space<vmem>>, %arg12: memref<32x128xf32, #tpu.memory_space<vmem>>, %arg13: memref<32x128xf32, #tpu.memory_space<vmem>>, %arg14: memref<1x128xf32, #tpu.memory_space<vmem>>, %arg15: memref<32x128xf32, #tpu.memory_space<vmem>>, %arg16: memref<1x128xf32, #tpu.memory_space<vmem>>, %arg17: memref<2x128xf32, #tpu.memory_space<vmem>>, %arg18: memref<2x2x32xf32, #tpu.memory_space<vmem>>, %arg19: memref<2x2x32xf32, #tpu.memory_space<vmem>>) attributes {dimension_semantics = [], scalar_prefetch = 0 : i64, scratch_operands = 0 : i64, tpu.core_type = #tpu.core_type<tc>} {
    %c0 = arith.constant 0 : index
    %c0_0 = arith.constant 0 : index
    %0 = vector.load %arg0[%c0, %c0_0] : memref<16x768xbf16, #tpu.memory_space<vmem>>, vector<16x768xbf16>
    %c0_1 = arith.constant 0 : index
    %c0_2 = arith.constant 0 : index
    %1 = vector.load %arg6[%c0_1, %c0_2] : memref<768x256xbf16, #tpu.memory_space<vmem>>, vector<768x256xbf16>
    %cst = arith.constant dense<0.000000e+00> : vector<16x256xf32>
    %2 = tpu.matmul %0, %1, %cst {dimension_numbers = #tpu.dot_dimension_numbers<[1], [0], [0], [1], [0, 0, 1, 1], [], []>} : vector<16x768xbf16>, vector<768x256xbf16>, vector<16x256xf32> -> vector<16x256xf32>
    %3 = vector.extract_strided_slice %2 {offsets = [0, 0], sizes = [16, 128], strides = [1, 1]} : vector<16x256xf32> to vector<16x128xf32>
    %4 = vector.shape_cast %3 : vector<16x128xf32> to vector<2x8x128xf32>
    %5 = vector.extract_strided_slice %2 {offsets = [0, 128], sizes = [16, 128], strides = [1, 1]} : vector<16x256xf32> to vector<16x128xf32>
    %6 = vector.shape_cast %5 : vector<16x128xf32> to vector<2x8x128xf32>
    %c0_3 = arith.constant 0 : index
    %c0_4 = arith.constant 0 : index
    %7 = vector.load %arg1[%c0_3, %c0_4] : memref<2x128xf32, #tpu.memory_space<vmem>>, vector<2x128xf32>
    %c0_5 = arith.constant 0 : index
    %c0_6 = arith.constant 0 : index
    %8 = vector.load %arg7[%c0_5, %c0_6] : memref<128x128xf32, #tpu.memory_space<vmem>>, vector<128x128xf32>
    %cst_7 = arith.constant dense<0.000000e+00> : vector<2x128xf32>
    %9 = tpu.matmul %7, %8, %cst_7 {dimension_numbers = #tpu.dot_dimension_numbers<[1], [0], [0], [1], [0, 0, 1, 1], [], []>} : vector<2x128xf32>, vector<128x128xf32>, vector<2x128xf32> -> vector<2x128xf32>
    %10 = vector.shape_cast %9 : vector<2x128xf32> to vector<2x1x128xf32>
    %11 = vector.broadcast %10 : vector<2x1x128xf32> to vector<2x8x128xf32>
    %12 = arith.mulf %4, %11 : vector<2x8x128xf32>
    %cst_8 = arith.constant dense<0.000000e+00> : vector<2x8xf32>
    %13 = vector.multi_reduction <add>, %12, %cst_8 [2] : vector<2x8x128xf32> to vector<2x8xf32>
    %cst_9 = arith.constant 0.0883883461 : f32
    %14 = vector.broadcast %cst_9 : f32 to vector<2x8xf32>
    %15 = arith.mulf %13, %14 : vector<2x8xf32>
    %c0_10 = arith.constant 0 : index
    %c0_11 = arith.constant 0 : index
    %16 = vector.load %arg2[%c0_10, %c0_11] : memref<2x8xf32, #tpu.memory_space<vmem>>, vector<2x8xf32>
    %17 = arith.addf %15, %16 : vector<2x8xf32>
    %cst_12 = arith.constant dense<0xFF800000> : vector<2xf32>
    %18 = vector.multi_reduction <maximumf>, %17, %cst_12 [1] : vector<2x8xf32> to vector<2xf32>
    %19 = vector.shape_cast %18 : vector<2xf32> to vector<2x1xf32>
    %20 = vector.broadcast %19 : vector<2x1xf32> to vector<2x8xf32>
    %21 = arith.subf %17, %20 : vector<2x8xf32>
    %22 = math.exp %21 : vector<2x8xf32>
    %cst_13 = arith.constant dense<0.000000e+00> : vector<2xf32>
    %23 = vector.multi_reduction <add>, %22, %cst_13 [1] : vector<2x8xf32> to vector<2xf32>
    %24 = vector.shape_cast %23 : vector<2xf32> to vector<2x1xf32>
    %25 = vector.broadcast %24 : vector<2x1xf32> to vector<2x8xf32>
    %26 = arith.divf %22, %25 : vector<2x8xf32>
    %27 = vector.shape_cast %26 : vector<2x8xf32> to vector<2x8x1xf32>
    %28 = vector.broadcast %27 : vector<2x8x1xf32> to vector<2x8x128xf32>
    %29 = arith.mulf %6, %28 : vector<2x8x128xf32>
    %cst_14 = arith.constant dense<0.000000e+00> : vector<2x128xf32>
    %30 = vector.multi_reduction <add>, %29, %cst_14 [1] : vector<2x8x128xf32> to vector<2x128xf32>
    %c0_15 = arith.constant 0 : index
    %c0_16 = arith.constant 0 : index
    %31 = vector.load %arg8[%c0_15, %c0_16] : memref<128x128xf32, #tpu.memory_space<vmem>>, vector<128x128xf32>
    %cst_17 = arith.constant dense<0.000000e+00> : vector<2x128xf32>
    %32 = tpu.matmul %30, %31, %cst_17 {dimension_numbers = #tpu.dot_dimension_numbers<[1], [0], [0], [1], [0, 0, 1, 1], [], []>} : vector<2x128xf32>, vector<128x128xf32>, vector<2x128xf32> -> vector<2x128xf32>
    %c0_18 = arith.constant 0 : index
    %c0_19 = arith.constant 0 : index
    %33 = vector.load %arg9[%c0_18, %c0_19] : memref<128x128xf32, #tpu.memory_space<vmem>>, vector<128x128xf32>
    %cst_20 = arith.constant dense<0.000000e+00> : vector<2x128xf32>
    %34 = tpu.matmul %7, %33, %cst_20 {dimension_numbers = #tpu.dot_dimension_numbers<[1], [0], [0], [1], [0, 0, 1, 1], [], []>} : vector<2x128xf32>, vector<128x128xf32>, vector<2x128xf32> -> vector<2x128xf32>
    %35 = arith.addf %32, %34 : vector<2x128xf32>
    %c0_21 = arith.constant 0 : index
    %c0_22 = arith.constant 0 : index
    %c0_23 = arith.constant 0 : index
    %36 = vector.load %arg3[%c0_21, %c0_22, %c0_23] : memref<2x2x32xf32, #tpu.memory_space<vmem>>, vector<1x2x32xf32>
    %37 = vector.shape_cast %36 : vector<1x2x32xf32> to vector<2x32xf32>
    %c0_24 = arith.constant 0 : index
    %c0_25 = arith.constant 0 : index
    %38 = vector.load %arg10[%c0_24, %c0_25] : memref<32x128xf32, #tpu.memory_space<vmem>>, vector<32x128xf32>
    %cst_26 = arith.constant dense<0.000000e+00> : vector<2x128xf32>
    %39 = tpu.matmul %37, %38, %cst_26 {dimension_numbers = #tpu.dot_dimension_numbers<[1], [0], [0], [1], [0, 0, 1, 1], [], []>} : vector<2x32xf32>, vector<32x128xf32>, vector<2x128xf32> -> vector<2x128xf32>
    %40 = arith.addf %35, %39 : vector<2x128xf32>
    %c0_27 = arith.constant 0 : index
    %c0_28 = arith.constant 0 : index
    %41 = vector.load %arg11[%c0_27, %c0_28] : memref<1x128xf32, #tpu.memory_space<vmem>>, vector<1x128xf32>
    %42 = vector.broadcast %41 : vector<1x128xf32> to vector<2x128xf32>
    %43 = arith.addf %40, %42 : vector<2x128xf32>
    %c0_29 = arith.constant 0 : index
    %c0_30 = arith.constant 0 : index
    %c0_31 = arith.constant 0 : index
    %44 = vector.load %arg4[%c0_29, %c0_30, %c0_31] : memref<2x2x32xf32, #tpu.memory_space<vmem>>, vector<1x2x32xf32>
    %45 = vector.shape_cast %44 : vector<1x2x32xf32> to vector<2x32xf32>
    %46 = arith.negf %43 : vector<2x128xf32>
    %47 = math.exp %46 : vector<2x128xf32>
    %cst_32 = arith.constant 1.000000e+00 : f32
    %48 = vector.broadcast %cst_32 : f32 to vector<2x128xf32>
    %49 = arith.addf %48, %47 : vector<2x128xf32>
    %50 = arith.divf %48, %49 : vector<2x128xf32>
    %51 = math.tanh %43 : vector<2x128xf32>
    %52 = vector.extract_strided_slice %50 {offsets = [0, 0], sizes = [2, 32], strides = [1, 1]} : vector<2x128xf32> to vector<2x32xf32>
    %53 = vector.extract_strided_slice %50 {offsets = [0, 32], sizes = [2, 32], strides = [1, 1]} : vector<2x128xf32> to vector<2x32xf32>
    %54 = vector.extract_strided_slice %51 {offsets = [0, 64], sizes = [2, 32], strides = [1, 1]} : vector<2x128xf32> to vector<2x32xf32>
    %55 = vector.extract_strided_slice %50 {offsets = [0, 96], sizes = [2, 32], strides = [1, 1]} : vector<2x128xf32> to vector<2x32xf32>
    %56 = arith.mulf %53, %45 : vector<2x32xf32>
    %57 = arith.mulf %52, %54 : vector<2x32xf32>
    %58 = arith.addf %56, %57 : vector<2x32xf32>
    %59 = math.tanh %58 : vector<2x32xf32>
    %60 = arith.mulf %55, %59 : vector<2x32xf32>
    %c0_33 = arith.constant 0 : index
    %c0_34 = arith.constant 0 : index
    %61 = vector.load %arg12[%c0_33, %c0_34] : memref<32x128xf32, #tpu.memory_space<vmem>>, vector<32x128xf32>
    %cst_35 = arith.constant dense<0.000000e+00> : vector<2x128xf32>
    %62 = tpu.matmul %60, %61, %cst_35 {dimension_numbers = #tpu.dot_dimension_numbers<[1], [0], [0], [1], [0, 0, 1, 1], [], []>} : vector<2x32xf32>, vector<32x128xf32>, vector<2x128xf32> -> vector<2x128xf32>
    %c1 = arith.constant 1 : index
    %c0_36 = arith.constant 0 : index
    %c0_37 = arith.constant 0 : index
    %63 = vector.load %arg3[%c1, %c0_36, %c0_37] : memref<2x2x32xf32, #tpu.memory_space<vmem>>, vector<1x2x32xf32>
    %64 = vector.shape_cast %63 : vector<1x2x32xf32> to vector<2x32xf32>
    %c0_38 = arith.constant 0 : index
    %c0_39 = arith.constant 0 : index
    %65 = vector.load %arg13[%c0_38, %c0_39] : memref<32x128xf32, #tpu.memory_space<vmem>>, vector<32x128xf32>
    %cst_40 = arith.constant dense<0.000000e+00> : vector<2x128xf32>
    %66 = tpu.matmul %64, %65, %cst_40 {dimension_numbers = #tpu.dot_dimension_numbers<[1], [0], [0], [1], [0, 0, 1, 1], [], []>} : vector<2x32xf32>, vector<32x128xf32>, vector<2x128xf32> -> vector<2x128xf32>
    %67 = arith.addf %62, %66 : vector<2x128xf32>
    %c0_41 = arith.constant 0 : index
    %c0_42 = arith.constant 0 : index
    %68 = vector.load %arg14[%c0_41, %c0_42] : memref<1x128xf32, #tpu.memory_space<vmem>>, vector<1x128xf32>
    %69 = vector.broadcast %68 : vector<1x128xf32> to vector<2x128xf32>
    %70 = arith.addf %67, %69 : vector<2x128xf32>
    %c1_43 = arith.constant 1 : index
    %c0_44 = arith.constant 0 : index
    %c0_45 = arith.constant 0 : index
    %71 = vector.load %arg4[%c1_43, %c0_44, %c0_45] : memref<2x2x32xf32, #tpu.memory_space<vmem>>, vector<1x2x32xf32>
    %72 = vector.shape_cast %71 : vector<1x2x32xf32> to vector<2x32xf32>
    %73 = arith.negf %70 : vector<2x128xf32>
    %74 = math.exp %73 : vector<2x128xf32>
    %cst_46 = arith.constant 1.000000e+00 : f32
    %75 = vector.broadcast %cst_46 : f32 to vector<2x128xf32>
    %76 = arith.addf %75, %74 : vector<2x128xf32>
    %77 = arith.divf %75, %76 : vector<2x128xf32>
    %78 = math.tanh %70 : vector<2x128xf32>
    %79 = vector.extract_strided_slice %77 {offsets = [0, 0], sizes = [2, 32], strides = [1, 1]} : vector<2x128xf32> to vector<2x32xf32>
    %80 = vector.extract_strided_slice %77 {offsets = [0, 32], sizes = [2, 32], strides = [1, 1]} : vector<2x128xf32> to vector<2x32xf32>
    %81 = vector.extract_strided_slice %78 {offsets = [0, 64], sizes = [2, 32], strides = [1, 1]} : vector<2x128xf32> to vector<2x32xf32>
    %82 = vector.extract_strided_slice %77 {offsets = [0, 96], sizes = [2, 32], strides = [1, 1]} : vector<2x128xf32> to vector<2x32xf32>
    %83 = arith.mulf %80, %72 : vector<2x32xf32>
    %84 = arith.mulf %79, %81 : vector<2x32xf32>
    %85 = arith.addf %83, %84 : vector<2x32xf32>
    %86 = math.tanh %85 : vector<2x32xf32>
    %87 = arith.mulf %82, %86 : vector<2x32xf32>
    %c0_47 = arith.constant 0 : index
    %c0_48 = arith.constant 0 : index
    %c0_49 = arith.constant 0 : index
    %88 = vector.load %arg18[%c0_47, %c0_48, %c0_49] : memref<2x2x32xf32, #tpu.memory_space<vmem>>, vector<1x2x32xf32>
    %89 = vector.shape_cast %88 : vector<1x2x32xf32> to vector<2x32xf32>
    %90 = vector.shape_cast %60 : vector<2x32xf32> to vector<1x2x32xf32>
    tpu.vector_store %arg18[%c0_47, %c0_48, %c0_49], %90 {strides = array<i32>} : memref<2x2x32xf32, #tpu.memory_space<vmem>>, vector<1x2x32xf32>,
    %c1_50 = arith.constant 1 : index
    %c0_51 = arith.constant 0 : index
    %c0_52 = arith.constant 0 : index
    %91 = vector.load %arg18[%c1_50, %c0_51, %c0_52] : memref<2x2x32xf32, #tpu.memory_space<vmem>>, vector<1x2x32xf32>
    %92 = vector.shape_cast %91 : vector<1x2x32xf32> to vector<2x32xf32>
    %93 = vector.shape_cast %87 : vector<2x32xf32> to vector<1x2x32xf32>
    tpu.vector_store %arg18[%c1_50, %c0_51, %c0_52], %93 {strides = array<i32>} : memref<2x2x32xf32, #tpu.memory_space<vmem>>, vector<1x2x32xf32>,
    %c0_53 = arith.constant 0 : index
    %c0_54 = arith.constant 0 : index
    %c0_55 = arith.constant 0 : index
    %94 = vector.load %arg19[%c0_53, %c0_54, %c0_55] : memref<2x2x32xf32, #tpu.memory_space<vmem>>, vector<1x2x32xf32>
    %95 = vector.shape_cast %94 : vector<1x2x32xf32> to vector<2x32xf32>
    %96 = vector.shape_cast %58 : vector<2x32xf32> to vector<1x2x32xf32>
    tpu.vector_store %arg19[%c0_53, %c0_54, %c0_55], %96 {strides = array<i32>} : memref<2x2x32xf32, #tpu.memory_space<vmem>>, vector<1x2x32xf32>,
    %c1_56 = arith.constant 1 : index
    %c0_57 = arith.constant 0 : index
    %c0_58 = arith.constant 0 : index
    %97 = vector.load %arg19[%c1_56, %c0_57, %c0_58] : memref<2x2x32xf32, #tpu.memory_space<vmem>>, vector<1x2x32xf32>
    %98 = vector.shape_cast %97 : vector<1x2x32xf32> to vector<2x32xf32>
    %99 = vector.shape_cast %85 : vector<2x32xf32> to vector<1x2x32xf32>
    tpu.vector_store %arg19[%c1_56, %c0_57, %c0_58], %99 {strides = array<i32>} : memref<2x2x32xf32, #tpu.memory_space<vmem>>, vector<1x2x32xf32>,
    %c0_59 = arith.constant 0 : index
    %c0_60 = arith.constant 0 : index
    %100 = vector.load %arg15[%c0_59, %c0_60] : memref<32x128xf32, #tpu.memory_space<vmem>>, vector<32x128xf32>
    %cst_61 = arith.constant dense<0.000000e+00> : vector<2x128xf32>
    %101 = tpu.matmul %87, %100, %cst_61 {dimension_numbers = #tpu.dot_dimension_numbers<[1], [0], [0], [1], [0, 0, 1, 1], [], []>} : vector<2x32xf32>, vector<32x128xf32>, vector<2x128xf32> -> vector<2x128xf32>
    %c0_62 = arith.constant 0 : index
    %c0_63 = arith.constant 0 : index
    %102 = vector.load %arg16[%c0_62, %c0_63] : memref<1x128xf32, #tpu.memory_space<vmem>>, vector<1x128xf32>
    %103 = vector.broadcast %102 : vector<1x128xf32> to vector<2x128xf32>
    %104 = arith.addf %101, %103 : vector<2x128xf32>
    %c0_64 = arith.constant 0 : index
    %c0_65 = arith.constant 0 : index
    %105 = vector.load %arg5[%c0_64, %c0_65] : memref<2x128xf32, #tpu.memory_space<vmem>>, vector<2x128xf32>
    %106 = arith.addf %104, %105 : vector<2x128xf32>
    %cst_66 = arith.constant dense<0xFF800000> : vector<2xf32>
    %107 = vector.multi_reduction <maximumf>, %106, %cst_66 [1] : vector<2x128xf32> to vector<2xf32>
    %108 = vector.shape_cast %107 : vector<2xf32> to vector<2x1xf32>
    %109 = vector.broadcast %108 : vector<2x1xf32> to vector<2x128xf32>
    %110 = arith.subf %106, %109 : vector<2x128xf32>
    %111 = math.exp %110 : vector<2x128xf32>
    %cst_67 = arith.constant dense<0.000000e+00> : vector<2xf32>
    %112 = vector.multi_reduction <add>, %111, %cst_67 [1] : vector<2x128xf32> to vector<2xf32>
    %113 = vector.shape_cast %112 : vector<2xf32> to vector<2x1xf32>
    %114 = vector.broadcast %113 : vector<2x1xf32> to vector<2x128xf32>
    %115 = arith.divf %111, %114 : vector<2x128xf32>
    %c0_68 = arith.constant 0 : index
    %c0_69 = arith.constant 0 : index
    %116 = vector.load %arg17[%c0_68, %c0_69] : memref<2x128xf32, #tpu.memory_space<vmem>>, vector<2x128xf32>
    tpu.vector_store %arg17[%c0_68, %c0_69], %115 {strides = array<i32>} : memref<2x128xf32, #tpu.memory_space<vmem>>, vector<2x128xf32>,
    return
  }
}

</mosaic_0001>

<llo_original>
// kernel: decoder_forward.1
$region0: #{decoder_forward.1}
  #allocation0 [shape = 'u32[]', space=smem, size = 0x4, offset = 0x4, fixed_abs, tag = 'smem constant byte address 0x4 - core index']
  #allocation1 [shape = 'u32[144,128]{1,0:T(1,128)}', space=vmem, size = 0x12000, scoped, tag = 'internal scratch']
  %s0 = inlined_call_operand.vmem [shape: bf16[16,768], index: 0, kind: input, shape index: {}]
  %s1 = inlined_call_operand.vmem [shape: f32[2,128], index: 1, kind: input, shape index: {}]
  %s2 = inlined_call_operand.vmem [shape: f32[2,8], index: 2, kind: input, shape index: {}]
  %s3 = inlined_call_operand.vmem [shape: f32[2,2,32], index: 3, kind: input, shape index: {}]
  %s4 = inlined_call_operand.vmem [shape: f32[2,2,32], index: 4, kind: input, shape index: {}]
  %s5 = inlined_call_operand.vmem [shape: f32[2,128], index: 5, kind: input, shape index: {}]
  %s6 = inlined_call_operand.hbm [shape: bf16[768,256], index: 6, kind: input, shape index: {}]
  %s7 = inlined_call_operand.vmem [shape: f32[128,128], index: 7, kind: input, shape index: {}]
  %s8 = inlined_call_operand.hbm [shape: f32[128,128], index: 8, kind: input, shape index: {}]
  %s9 = inlined_call_operand.hbm [shape: f32[128,128], index: 9, kind: input, shape index: {}]
  %s10 = inlined_call_operand.vmem [shape: f32[32,128], index: 10, kind: input, shape index: {}]
  %s11 = inlined_call_operand.vmem [shape: f32[1,128], index: 11, kind: input, shape index: {}]
  %s12 = inlined_call_operand.hbm [shape: f32[32,128], index: 12, kind: input, shape index: {}]
  %s13 = inlined_call_operand.hbm [shape: f32[32,128], index: 13, kind: input, shape index: {}]
  %s14 = inlined_call_operand.vmem [shape: f32[1,128], index: 14, kind: input, shape index: {}]
  %s15 = inlined_call_operand.hbm [shape: f32[32,128], index: 15, kind: input, shape index: {}]
  %s16 = inlined_call_operand.vmem [shape: f32[1,128], index: 16, kind: input, shape index: {}]
  %s17 = inlined_call_operand.hbm [shape: f32[2,128], index: 17, kind: output, shape index: {0}]
  %s18 = inlined_call_operand.hbm [shape: f32[2,2,32], index: 18, kind: output, shape index: {1}]
  %s19 = inlined_call_operand.hbm [shape: f32[2,2,32], index: 19, kind: output, shape index: {2}]
  %20 = xla_tuple %s17, %s18, %s19
  %s21 = sld [smem:[#allocation0]]
  $region118: #{decoder_forward.1} parent=0
    _
  %s23 = ssub.s32 1, %s21
  %s24 = scalar_select 0, %s23, %s21
  $region1: #{decoder_forward.1} parent=0
    #allocation2 [shape = 'u8[393216]{0}', space=vmem, size = 0x60000, scoped, tag = 'input window, operand 6, single buffered']
    #allocation3 [shape = 's32[1]{0}', space=sflag, size = 0x4, scoped, tag = 'scoped memory for decoder_forward.1']
    #allocation4 [shape = 's32[1]{0}', space=sflag, size = 0x4, scoped, tag = 'scoped memory for decoder_forward.1']
    #allocation5 [shape = 'u8[65536]{0}', space=vmem, size = 0x10000, scoped, tag = 'input window, operand 8, single buffered']
    #allocation6 [shape = 's32[1]{0}', space=sflag, size = 0x4, scoped, tag = 'scoped memory for decoder_forward.1']
    #allocation7 [shape = 'u8[65536]{0}', space=vmem, size = 0x10000, scoped, tag = 'input window, operand 9, single buffered']
    #allocation8 [shape = 'u8[16384]{0}', space=vmem, size = 0x4000, scoped, tag = 'input window, operand 12, single buffered']
    #allocation9 [shape = 's32[1]{0}', space=sflag, size = 0x4, scoped, tag = 'scoped memory for decoder_forward.1']
    #allocation10 [shape = 'u8[16384]{0}', space=vmem, size = 0x4000, scoped, tag = 'input window, operand 13, single buffered']
    #allocation11 [shape = 'u8[16384]{0}', space=vmem, size = 0x4000, scoped, tag = 'input window, operand 15, single buffered']
    #allocation12 [shape = 's32[1]{0}', space=sflag, size = 0x4, scoped, tag = 'scoped memory for decoder_forward.1']
    #allocation13 [shape = 'u8[1024]{0}', space=vmem, size = 0x400, scoped, tag = 'output window, operand 0, single buffered']
    #allocation14 [shape = 'u8[2048]{0}', space=vmem, size = 0x800, scoped, tag = 'output window, operand 1, single buffered']
    #allocation15 [shape = 's32[1]{0}', space=sflag, size = 0x4, scoped, tag = 'scoped memory for decoder_forward.1']
    #allocation16 [shape = 'u8[2048]{0}', space=vmem, size = 0x800, scoped, tag = 'output window, operand 2, single buffered']
    %25 = vsyncpa [#allocation3], 0
    %26 = vsyncpa [#allocation6], 0
    %27 = vsyncpa [#allocation9], 0
    %28 = vsyncpa [#allocation12], 0
    %29 = vsyncpa [#allocation4], 0
    %30 = vsyncpa [#allocation15], 0
    // Predicated region
    $region2: #{decoder_forward.1} parent=1 // pred_check
      _
    $region3: #{decoder_forward.1} parent=1 // pred_check_branch
      %32 = sbr.rel (0) target = $region5
    $region4: #{decoder_forward.1} parent=1 // pred_region
      _
    $region5: #{decoder_forward.1} parent=1 // pred_fallthru
      _
    // Predicated region
    $region6: #{decoder_forward.1} parent=1 // pred_check
      _
    $region7: #{decoder_forward.1} parent=1 // pred_check_branch
      %34 = sbr.rel (0) target = $region9
    $region8: #{decoder_forward.1} parent=1 // pred_region
      _
    $region9: #{decoder_forward.1} parent=1 // pred_fallthru
      _
    // Predicated region
    $region10: #{decoder_forward.1} parent=1 // pred_check
      _
    $region11: #{decoder_forward.1} parent=1 // pred_check_branch
      %36 = sbr.rel (0) target = $region13
    $region12: #{decoder_forward.1} parent=1 // pred_region
      _
    $region13: #{decoder_forward.1} parent=1 // pred_fallthru
      _
    // Predicated region
    $region14: #{decoder_forward.1} parent=1 // pred_check
      _
    $region15: #{decoder_forward.1} parent=1 // pred_check_branch
      %38 = sbr.rel (0) target = $region17
    $region16: #{decoder_forward.1} parent=1 // pred_region
      _
    $region17: #{decoder_forward.1} parent=1 // pred_fallthru
      _
    // Predicated region
    $region18: #{decoder_forward.1} parent=1 // pred_check
      _
    $region19: #{decoder_forward.1} parent=1 // pred_check_branch
      %40 = sbr.rel (0) target = $region21
    $region20: #{decoder_forward.1} parent=1 // pred_region
      _
    $region21: #{decoder_forward.1} parent=1 // pred_fallthru
      _
    // Predicated region
    $region22: #{decoder_forward.1} parent=1 // pred_check
      _
    $region23: #{decoder_forward.1} parent=1 // pred_check_branch
      %42 = sbr.rel (0) target = $region25
    $region24: #{decoder_forward.1} parent=1 // pred_region
      _
    $region25: #{decoder_forward.1} parent=1 // pred_fallthru
      _
    // Predicated region
    $region26: #{decoder_forward.1} parent=1 // pred_check
      _
    $region27: #{decoder_forward.1} parent=1 // pred_check_branch
      %44 = sbr.rel (0) target = $region29
    $region28: #{decoder_forward.1} parent=1 // pred_region
      %s46 = ssub.s32 12288, 12288
      %47 = vsyncadd [#allocation3], %s46
      %s48 = sshll.u32 [#allocation2], 4
      %s49 = int_to_ptr.vmem [resolvable:$true] %s48
      %54 = dma.hbm_to_vmem [thread:$0]  %s6, 12288, %s49, [#allocation3], 128, 128, 8
    $region29: #{decoder_forward.1} parent=1 // pred_fallthru
      _
    // Predicated region
    $region30: #{decoder_forward.1} parent=1 // pred_check
      _
    $region31: #{decoder_forward.1} parent=1 // pred_check_branch
      %56 = sbr.rel (0) target = $region33
    $region32: #{decoder_forward.1} parent=1 // pred_region
      _
    $region33: #{decoder_forward.1} parent=1 // pred_fallthru
      _
    // Predicated region
    $region34: #{decoder_forward.1} parent=1 // pred_check
      _
    $region35: #{decoder_forward.1} parent=1 // pred_check_branch
      %58 = sbr.rel (0) target = $region37
    $region36: #{decoder_forward.1} parent=1 // pred_region
      %s60 = ssub.s32 2048, 2048
      %61 = vsyncadd [#allocation6], %s60
      %s62 = sshll.u32 [#allocation5], 4
      %s63 = int_to_ptr.vmem [resolvable:$true] %s62
      %68 = dma.hbm_to_vmem [thread:$0]  %s8, 2048, %s63, [#allocation6], 128, 128, 8
    $region37: #{decoder_forward.1} parent=1 // pred_fallthru
      _
    // Predicated region
    $region38: #{decoder_forward.1} parent=1 // pred_check
      _
    $region39: #{decoder_forward.1} parent=1 // pred_check_branch
      %70 = sbr.rel (0) target = $region41
    $region40: #{decoder_forward.1} parent=1 // pred_region
      %s72 = ssub.s32 2048, 2048
      %73 = vsyncadd [#allocation6], %s72
      %s74 = sshll.u32 [#allocation7], 4
      %s75 = int_to_ptr.vmem [resolvable:$true] %s74
      %80 = dma.hbm_to_vmem [thread:$0]  %s9, 2048, %s75, [#allocation6], 128, 128, 8
    $region41: #{decoder_forward.1} parent=1 // pred_fallthru
      _
    // Predicated region
    $region42: #{decoder_forward.1} parent=1 // pred_check
      _
    $region43: #{decoder_forward.1} parent=1 // pred_check_branch
      %82 = sbr.rel (0) target = $region45
    $region44: #{decoder_forward.1} parent=1 // pred_region
      _
    $region45: #{decoder_forward.1} parent=1 // pred_fallthru
      _
    // Predicated region
    $region46: #{decoder_forward.1} parent=1 // pred_check
      _
    $region47: #{decoder_forward.1} parent=1 // pred_check_branch
      %84 = sbr.rel (0) target = $region49
    $region48: #{decoder_forward.1} parent=1 // pred_region
      _
    $region49: #{decoder_forward.1} parent=1 // pred_fallthru
      _
    // Predicated region
    $region50: #{decoder_forward.1} parent=1 // pred_check
      _
    $region51: #{decoder_forward.1} parent=1 // pred_check_branch
      %86 = sbr.rel (0) target = $region53
    $region52: #{decoder_forward.1} parent=1 // pred_region
      %s88 = ssub.s32 512, 512
      %89 = vsyncadd [#allocation9], %s88
      %s90 = sshll.u32 [#allocation8], 4
      %s91 = int_to_ptr.vmem [resolvable:$true] %s90
      %96 = dma.hbm_to_vmem [thread:$0]  %s12, 512, %s91, [#allocation9], 128, 128, 8
    $region53: #{decoder_forward.1} parent=1 // pred_fallthru
      _
    // Predicated region
    $region54: #{decoder_forward.1} parent=1 // pred_check
      _
    $region55: #{decoder_forward.1} parent=1 // pred_check_branch
      %98 = sbr.rel (0) target = $region57
    $region56: #{decoder_forward.1} parent=1 // pred_region
      %s100 = ssub.s32 512, 512
      %101 = vsyncadd [#allocation9], %s100
      %s102 = sshll.u32 [#allocation10], 4
      %s103 = int_to_ptr.vmem [resolvable:$true] %s102
      %108 = dma.hbm_to_vmem [thread:$0]  %s13, 512, %s103, [#allocation9], 128, 128, 8
    $region57: #{decoder_forward.1} parent=1 // pred_fallthru
      _
    // Predicated region
    $region58: #{decoder_forward.1} parent=1 // pred_check
      _
    $region59: #{decoder_forward.1} parent=1 // pred_check_branch
      %110 = sbr.rel (0) target = $region61
    $region60: #{decoder_forward.1} parent=1 // pred_region
      _
    $region61: #{decoder_forward.1} parent=1 // pred_fallthru
      _
    // Predicated region
    $region62: #{decoder_forward.1} parent=1 // pred_check
      _
    $region63: #{decoder_forward.1} parent=1 // pred_check_branch
      %112 = sbr.rel (0) target = $region65
    $region64: #{decoder_forward.1} parent=1 // pred_region
      %s114 = ssub.s32 512, 512
      %115 = vsyncadd [#allocation12], %s114
      %s116 = sshll.u32 [#allocation11], 4
      %s117 = int_to_ptr.vmem [resolvable:$true] %s116
      %122 = dma.hbm_to_vmem [thread:$0]  %s15, 512, %s117, [#allocation12], 128, 128, 8
    $region65: #{decoder_forward.1} parent=1 // pred_fallthru
      _
    // Predicated region
    $region66: #{decoder_forward.1} parent=1 // pred_check
      _
    $region67: #{decoder_forward.1} parent=1 // pred_check_branch
      %124 = sbr.rel (0) target = $region69
    $region68: #{decoder_forward.1} parent=1 // pred_region
      _
    $region69: #{decoder_forward.1} parent=1 // pred_fallthru
      _
    // Predicated region
    $region70: #{decoder_forward.1} parent=1 // pred_check
      _
    $region71: #{decoder_forward.1} parent=1 // pred_check_branch
      %126 = sbr.rel (0) target = $region73
    $region72: #{decoder_forward.1} parent=1 // pred_region
      %127 = dma.done [#allocation3], 12288
    $region73: #{decoder_forward.1} parent=1 // pred_fallthru
      _
    // Predicated region
    $region74: #{decoder_forward.1} parent=1 // pred_check
      _
    $region75: #{decoder_forward.1} parent=1 // pred_check_branch
      %129 = sbr.rel (0) target = $region77
    $region76: #{decoder_forward.1} parent=1 // pred_region
      %130 = dma.done [#allocation6], 2048
    $region77: #{decoder_forward.1} parent=1 // pred_fallthru
      _
    // Predicated region
    $region78: #{decoder_forward.1} parent=1 // pred_check
      _
    $region79: #{decoder_forward.1} parent=1 // pred_check_branch
      %132 = sbr.rel (0) target = $region81
    $region80: #{decoder_forward.1} parent=1 // pred_region
      %133 = dma.done [#allocation6], 2048
    $region81: #{decoder_forward.1} parent=1 // pred_fallthru
      _
    // Predicated region
    $region82: #{decoder_forward.1} parent=1 // pred_check
      _
    $region83: #{decoder_forward.1} parent=1 // pred_check_branch
      %135 = sbr.rel (0) target = $region85
    $region84: #{decoder_forward.1} parent=1 // pred_region
      %136 = dma.done [#allocation9], 512
    $region85: #{decoder_forward.1} parent=1 // pred_fallthru
      _
    // Predicated region
    $region86: #{decoder_forward.1} parent=1 // pred_check
      _
    $region87: #{decoder_forward.1} parent=1 // pred_check_branch
      %138 = sbr.rel (0) target = $region89
    $region88: #{decoder_forward.1} parent=1 // pred_region
      %139 = dma.done [#allocation9], 512
    $region89: #{decoder_forward.1} parent=1 // pred_fallthru
      _
    // Predicated region
    $region90: #{decoder_forward.1} parent=1 // pred_check
      _
    $region91: #{decoder_forward.1} parent=1 // pred_check_branch
      %141 = sbr.rel (0) target = $region93
    $region92: #{decoder_forward.1} parent=1 // pred_region
      %142 = dma.done [#allocation12], 512
    $region93: #{decoder_forward.1} parent=1 // pred_fallthru
      _
    %v143 = vld [vmem:[%s0] sm:$0xff]
    %v144 = vld [vmem:[%s0 + $0x8] sm:$0xff]
    %v145 = vld [vmem:[%s0 + $0x10] sm:$0xff]
    %v146 = vld [vmem:[%s0 + $0x18] sm:$0xff]
    %v147 = vld [vmem:[%s0 + $0x20] sm:$0xff]
    %v148 = vld [vmem:[%s0 + $0x28] sm:$0xff]
    %v149 = vld [vmem:[#allocation2] sm:$0xff]
    %v150 = vld [vmem:[#allocation2 + $0x8] sm:$0xff]
    %v151 = vld [vmem:[#allocation2 + $0x10] sm:$0xff]
    %v152 = vld [vmem:[#allocation2 + $0x18] sm:$0xff]
    %v153 = vld [vmem:[#allocation2 + $0x20] sm:$0xff]
    %v154 = vld [vmem:[#allocation2 + $0x28] sm:$0xff]
    %v155 = vld [vmem:[#allocation2 + $0x30] sm:$0xff]
    %v156 = vld [vmem:[#allocation2 + $0x38] sm:$0xff]
    %v157 = vld [vmem:[#allocation2 + $0x40] sm:$0xff]
    %v158 = vld [vmem:[#allocation2 + $0x48] sm:$0xff]
    %v159 = vld [vmem:[#allocation2 + $0x50] sm:$0xff]
    %v160 = vld [vmem:[#allocation2 + $0x58] sm:$0xff]
    %v161 = vld [vmem:[#allocation2 + $0x60] sm:$0xff]
    %v162 = vld [vmem:[#allocation2 + $0x68] sm:$0xff]
    %v163 = vld [vmem:[#allocation2 + $0x70] sm:$0xff]
    %v164 = vld [vmem:[#allocation2 + $0x78] sm:$0xff]
    %v165 = vld [vmem:[#allocation2 + $0x80] sm:$0xff]
    %v166 = vld [vmem:[#allocation2 + $0x88] sm:$0xff]
    %v167 = vld [vmem:[#allocation2 + $0x90] sm:$0xff]
    %v168 = vld [vmem:[#allocation2 + $0x98] sm:$0xff]
    %v169 = vld [vmem:[#allocation2 + $0xa0] sm:$0xff]
    %v170 = vld [vmem:[#allocation2 + $0xa8] sm:$0xff]
    %v171 = vld [vmem:[#allocation2 + $0xb0] sm:$0xff]
    %v172 = vld [vmem:[#allocation2 + $0xb8] sm:$0xff]
    %v173 = vld [vmem:[#allocation2 + $0xc0] sm:$0xff]
    %v174 = vld [vmem:[#allocation2 + $0xc8] sm:$0xff]
    %v175 = vld [vmem:[#allocation2 + $0xd0] sm:$0xff]
    %v176 = vld [vmem:[#allocation2 + $0xd8] sm:$0xff]
    %v177 = vld [vmem:[#allocation2 + $0xe0] sm:$0xff]
    %v178 = vld [vmem:[#allocation2 + $0xe8] sm:$0xff]
    %v179 = vld [vmem:[#allocation2 + $0xf0] sm:$0xff]
    %v180 = vld [vmem:[#allocation2 + $0xf8] sm:$0xff]
    %v181 = vld [vmem:[#allocation2 + $0x100] sm:$0xff]
    %v182 = vld [vmem:[#allocation2 + $0x108] sm:$0xff]
    %v183 = vld [vmem:[#allocation2 + $0x110] sm:$0xff]
    %v184 = vld [vmem:[#allocation2 + $0x118] sm:$0xff]
    %v185 = vld [vmem:[#allocation2 + $0x120] sm:$0xff]
    %v186 = vld [vmem:[#allocation2 + $0x128] sm:$0xff]
    %v187 = vld [vmem:[#allocation2 + $0x130] sm:$0xff]
    %v188 = vld [vmem:[#allocation2 + $0x138] sm:$0xff]
    %v189 = vld [vmem:[#allocation2 + $0x140] sm:$0xff]
    %v190 = vld [vmem:[#allocation2 + $0x148] sm:$0xff]
    %v191 = vld [vmem:[#allocation2 + $0x150] sm:$0xff]
    %v192 = vld [vmem:[#allocation2 + $0x158] sm:$0xff]
    %v193 = vld [vmem:[#allocation2 + $0x160] sm:$0xff]
    %v194 = vld [vmem:[#allocation2 + $0x168] sm:$0xff]
    %v195 = vld [vmem:[#allocation2 + $0x170] sm:$0xff]
    %v196 = vld [vmem:[#allocation2 + $0x178] sm:$0xff]
    %v197 = vld [vmem:[#allocation2 + $0x180] sm:$0xff]
    %v198 = vld [vmem:[#allocation2 + $0x188] sm:$0xff]
    %v199 = vld [vmem:[#allocation2 + $0x190] sm:$0xff]
    %v200 = vld [vmem:[#allocation2 + $0x198] sm:$0xff]
    %v201 = vld [vmem:[#allocation2 + $0x1a0] sm:$0xff]
    %v202 = vld [vmem:[#allocation2 + $0x1a8] sm:$0xff]
    %v203 = vld [vmem:[#allocation2 + $0x1b0] sm:$0xff]
    %v204 = vld [vmem:[#allocation2 + $0x1b8] sm:$0xff]
    %v205 = vld [vmem:[#allocation2 + $0x1c0] sm:$0xff]
    %v206 = vld [vmem:[#allocation2 + $0x1c8] sm:$0xff]
    %v207 = vld [vmem:[#allocation2 + $0x1d0] sm:$0xff]
    %v208 = vld [vmem:[#allocation2 + $0x1d8] sm:$0xff]
    %v209 = vld [vmem:[#allocation2 + $0x1e0] sm:$0xff]
    %v210 = vld [vmem:[#allocation2 + $0x1e8] sm:$0xff]
    %v211 = vld [vmem:[#allocation2 + $0x1f0] sm:$0xff]
    %v212 = vld [vmem:[#allocation2 + $0x1f8] sm:$0xff]
    %v213 = vld [vmem:[#allocation2 + $0x200] sm:$0xff]
    %v214 = vld [vmem:[#allocation2 + $0x208] sm:$0xff]
    %v215 = vld [vmem:[#allocation2 + $0x210] sm:$0xff]
    %v216 = vld [vmem:[#allocation2 + $0x218] sm:$0xff]
    %v217 = vld [vmem:[#allocation2 + $0x220] sm:$0xff]
    %v218 = vld [vmem:[#allocation2 + $0x228] sm:$0xff]
    %v219 = vld [vmem:[#allocation2 + $0x230] sm:$0xff]
    %v220 = vld [vmem:[#allocation2 + $0x238] sm:$0xff]
    %v221 = vld [vmem:[#allocation2 + $0x240] sm:$0xff]
    %v222 = vld [vmem:[#allocation2 + $0x248] sm:$0xff]
    %v223 = vld [vmem:[#allocation2 + $0x250] sm:$0xff]
    %v224 = vld [vmem:[#allocation2 + $0x258] sm:$0xff]
    %v225 = vld [vmem:[#allocation2 + $0x260] sm:$0xff]
    %v226 = vld [vmem:[#allocation2 + $0x268] sm:$0xff]
    %v227 = vld [vmem:[#allocation2 + $0x270] sm:$0xff]
    %v228 = vld [vmem:[#allocation2 + $0x278] sm:$0xff]
    %v229 = vld [vmem:[#allocation2 + $0x280] sm:$0xff]
    %v230 = vld [vmem:[#allocation2 + $0x288] sm:$0xff]
    %v231 = vld [vmem:[#allocation2 + $0x290] sm:$0xff]
    %v232 = vld [vmem:[#allocation2 + $0x298] sm:$0xff]
    %v233 = vld [vmem:[#allocation2 + $0x2a0] sm:$0xff]
    %v234 = vld [vmem:[#allocation2 + $0x2a8] sm:$0xff]
    %v235 = vld [vmem:[#allocation2 + $0x2b0] sm:$0xff]
    %v236 = vld [vmem:[#allocation2 + $0x2b8] sm:$0xff]
    %v237 = vld [vmem:[#allocation2 + $0x2c0] sm:$0xff]
    %v238 = vld [vmem:[#allocation2 + $0x2c8] sm:$0xff]
    %v239 = vld [vmem:[#allocation2 + $0x2d0] sm:$0xff]
    %v240 = vld [vmem:[#allocation2 + $0x2d8] sm:$0xff]
    %v241 = vld [vmem:[#allocation2 + $0x2e0] sm:$0xff]
    %v242 = vld [vmem:[#allocation2 + $0x2e8] sm:$0xff]
    %v243 = vld [vmem:[#allocation2 + $0x2f0] sm:$0xff]
    %v244 = vld [vmem:[#allocation2 + $0x2f8] sm:$0xff]
    %v251 = vunpack.c.l.b16 %v143
    %v252 = vunpack.c.h.b16 %v143
    %v253 = vunpack.c.l.b16 %v144
    %v254 = vunpack.c.h.b16 %v144
    %v255 = vunpack.c.l.b16 %v145
    %v256 = vunpack.c.h.b16 %v145
    %v257 = vunpack.c.l.b16 %v146
    %v258 = vunpack.c.h.b16 %v146
    %v259 = vunpack.c.l.b16 %v147
    %v260 = vunpack.c.h.b16 %v147
    %v261 = vunpack.c.l.b16 %v148
    %v262 = vunpack.c.h.b16 %v148
    %v263 = vpack.c.b16 %v257, %v251
    %v264 = vpack.c.b16 %v258, %v252
    %v265 = vpack.c.b16 %v259, %v253
    %v266 = vpack.c.b16 %v260, %v254
    %v267 = vpack.c.b16 %v261, %v255
    %v268 = vpack.c.b16 %v262, %v256
    %v371 = vunpack.c.l.b16 %v149
    %v372 = vunpack.c.h.b16 %v149
    %v373 = vunpack.c.l.b16 %v150
    %v374 = vunpack.c.h.b16 %v150
    %v375 = vunpack.c.l.b16 %v151
    %v376 = vunpack.c.h.b16 %v151
    %v377 = vunpack.c.l.b16 %v152
    %v378 = vunpack.c.h.b16 %v152
    %v379 = vunpack.c.l.b16 %v153
    %v380 = vunpack.c.h.b16 %v153
    %v381 = vunpack.c.l.b16 %v154
    %v382 = vunpack.c.h.b16 %v154
    %v383 = vunpack.c.l.b16 %v155
    %v384 = vunpack.c.h.b16 %v155
    %v385 = vunpack.c.l.b16 %v156
    %v386 = vunpack.c.h.b16 %v156
    %v387 = vunpack.c.l.b16 %v157
    %v388 = vunpack.c.h.b16 %v157
    %v389 = vunpack.c.l.b16 %v158
    %v390 = vunpack.c.h.b16 %v158
    %v391 = vunpack.c.l.b16 %v159
    %v392 = vunpack.c.h.b16 %v159
    %v393 = vunpack.c.l.b16 %v160
    %v394 = vunpack.c.h.b16 %v160
    %v395 = vunpack.c.l.b16 %v161
    %v396 = vunpack.c.h.b16 %v161
    %v397 = vunpack.c.l.b16 %v162
    %v398 = vunpack.c.h.b16 %v162
    %v399 = vunpack.c.l.b16 %v163
    %v400 = vunpack.c.h.b16 %v163
    %v401 = vunpack.c.l.b16 %v164
    %v402 = vunpack.c.h.b16 %v164
    %v403 = vunpack.c.l.b16 %v165
    %v404 = vunpack.c.h.b16 %v165
    %v405 = vunpack.c.l.b16 %v166
    %v406 = vunpack.c.h.b16 %v166
    %v407 = vunpack.c.l.b16 %v167
    %v408 = vunpack.c.h.b16 %v167
    %v409 = vunpack.c.l.b16 %v168
    %v410 = vunpack.c.h.b16 %v168
    %v411 = vunpack.c.l.b16 %v169
    %v412 = vunpack.c.h.b16 %v169
    %v413 = vunpack.c.l.b16 %v170
    %v414 = vunpack.c.h.b16 %v170
    %v415 = vunpack.c.l.b16 %v171
    %v416 = vunpack.c.h.b16 %v171
    %v417 = vunpack.c.l.b16 %v172
    %v418 = vunpack.c.h.b16 %v172
    %v419 = vunpack.c.l.b16 %v173
    %v420 = vunpack.c.h.b16 %v173
    %v421 = vunpack.c.l.b16 %v174
    %v422 = vunpack.c.h.b16 %v174
    %v423 = vunpack.c.l.b16 %v175
    %v424 = vunpack.c.h.b16 %v175
    %v425 = vunpack.c.l.b16 %v176
    %v426 = vunpack.c.h.b16 %v176
    %v427 = vunpack.c.l.b16 %v177
    %v428 = vunpack.c.h.b16 %v177
    %v429 = vunpack.c.l.b16 %v178
    %v430 = vunpack.c.h.b16 %v178
    %v431 = vunpack.c.l.b16 %v179
    %v432 = vunpack.c.h.b16 %v179
    %v433 = vunpack.c.l.b16 %v180
    %v434 = vunpack.c.h.b16 %v180
    %v435 = vunpack.c.l.b16 %v181
    %v436 = vunpack.c.h.b16 %v181
    %v437 = vunpack.c.l.b16 %v182
    %v438 = vunpack.c.h.b16 %v182
    %v439 = vunpack.c.l.b16 %v183
    %v440 = vunpack.c.h.b16 %v183
    %v441 = vunpack.c.l.b16 %v184
    %v442 = vunpack.c.h.b16 %v184
    %v443 = vunpack.c.l.b16 %v185
    %v444 = vunpack.c.h.b16 %v185
    %v445 = vunpack.c.l.b16 %v186
    %v446 = vunpack.c.h.b16 %v186
    %v447 = vunpack.c.l.b16 %v187
    %v448 = vunpack.c.h.b16 %v187
    %v449 = vunpack.c.l.b16 %v188
    %v450 = vunpack.c.h.b16 %v188
    %v451 = vunpack.c.l.b16 %v189
    %v452 = vunpack.c.h.b16 %v189
    %v453 = vunpack.c.l.b16 %v190
    %v454 = vunpack.c.h.b16 %v190
    %v455 = vunpack.c.l.b16 %v191
    %v456 = vunpack.c.h.b16 %v191
    %v457 = vunpack.c.l.b16 %v192
    %v458 = vunpack.c.h.b16 %v192
    %v459 = vunpack.c.l.b16 %v193
    %v460 = vunpack.c.h.b16 %v193
    %v461 = vunpack.c.l.b16 %v194
    %v462 = vunpack.c.h.b16 %v194
    %v463 = vunpack.c.l.b16 %v195
    %v464 = vunpack.c.h.b16 %v195
    %v465 = vunpack.c.l.b16 %v196
    %v466 = vunpack.c.h.b16 %v196
    %v467 = vunpack.c.l.b16 %v197
    %v468 = vunpack.c.h.b16 %v197
    %v469 = vunpack.c.l.b16 %v198
    %v470 = vunpack.c.h.b16 %v198
    %v471 = vunpack.c.l.b16 %v199
    %v472 = vunpack.c.h.b16 %v199
    %v473 = vunpack.c.l.b16 %v200
    %v474 = vunpack.c.h.b16 %v200
    %v475 = vunpack.c.l.b16 %v201
    %v476 = vunpack.c.h.b16 %v201
    %v477 = vunpack.c.l.b16 %v202
    %v478 = vunpack.c.h.b16 %v202
    %v479 = vunpack.c.l.b16 %v203
    %v480 = vunpack.c.h.b16 %v203
    %v481 = vunpack.c.l.b16 %v204
    %v482 = vunpack.c.h.b16 %v204
    %v483 = vunpack.c.l.b16 %v205
    %v484 = vunpack.c.h.b16 %v205
    %v485 = vunpack.c.l.b16 %v206
    %v486 = vunpack.c.h.b16 %v206
    %v487 = vunpack.c.l.b16 %v207
    %v488 = vunpack.c.h.b16 %v207
    %v489 = vunpack.c.l.b16 %v208
    %v490 = vunpack.c.h.b16 %v208
    %v491 = vunpack.c.l.b16 %v209
    %v492 = vunpack.c.h.b16 %v209
    %v493 = vunpack.c.l.b16 %v210
    %v494 = vunpack.c.h.b16 %v210
    %v495 = vunpack.c.l.b16 %v211
    %v496 = vunpack.c.h.b16 %v211
    %v497 = vunpack.c.l.b16 %v212
    %v498 = vunpack.c.h.b16 %v212
    %v499 = vunpack.c.l.b16 %v213
    %v500 = vunpack.c.h.b16 %v213
    %v501 = vunpack.c.l.b16 %v214
    %v502 = vunpack.c.h.b16 %v214
    %v503 = vunpack.c.l.b16 %v215
    %v504 = vunpack.c.h.b16 %v215
    %v505 = vunpack.c.l.b16 %v216
    %v506 = vunpack.c.h.b16 %v216
    %v507 = vunpack.c.l.b16 %v217
    %v508 = vunpack.c.h.b16 %v217
    %v509 = vunpack.c.l.b16 %v218
    %v510 = vunpack.c.h.b16 %v218
    %v511 = vunpack.c.l.b16 %v219
    %v512 = vunpack.c.h.b16 %v219
    %v513 = vunpack.c.l.b16 %v220
    %v514 = vunpack.c.h.b16 %v220
    %v515 = vunpack.c.l.b16 %v221
    %v516 = vunpack.c.h.b16 %v221
    %v517 = vunpack.c.l.b16 %v222
    %v518 = vunpack.c.h.b16 %v222
    %v519 = vunpack.c.l.b16 %v223
    %v520 = vunpack.c.h.b16 %v223
    %v521 = vunpack.c.l.b16 %v224
    %v522 = vunpack.c.h.b16 %v224
    %v523 = vunpack.c.l.b16 %v225
    %v524 = vunpack.c.h.b16 %v225
    %v525 = vunpack.c.l.b16 %v226
    %v526 = vunpack.c.h.b16 %v226
    %v527 = vunpack.c.l.b16 %v227
    %v528 = vunpack.c.h.b16 %v227
    %v529 = vunpack.c.l.b16 %v228
    %v530 = vunpack.c.h.b16 %v228
    %v531 = vunpack.c.l.b16 %v229
    %v532 = vunpack.c.h.b16 %v229
    %v533 = vunpack.c.l.b16 %v230
    %v534 = vunpack.c.h.b16 %v230
    %v535 = vunpack.c.l.b16 %v231
    %v536 = vunpack.c.h.b16 %v231
    %v537 = vunpack.c.l.b16 %v232
    %v538 = vunpack.c.h.b16 %v232
    %v539 = vunpack.c.l.b16 %v233
    %v540 = vunpack.c.h.b16 %v233
    %v541 = vunpack.c.l.b16 %v234
    %v542 = vunpack.c.h.b16 %v234
    %v543 = vunpack.c.l.b16 %v235
    %v544 = vunpack.c.h.b16 %v235
    %v545 = vunpack.c.l.b16 %v236
    %v546 = vunpack.c.h.b16 %v236
    %v547 = vunpack.c.l.b16 %v237
    %v548 = vunpack.c.h.b16 %v237
    %v549 = vunpack.c.l.b16 %v238
    %v550 = vunpack.c.h.b16 %v238
    %v551 = vunpack.c.l.b16 %v239
    %v552 = vunpack.c.h.b16 %v239
    %v553 = vunpack.c.l.b16 %v240
    %v554 = vunpack.c.h.b16 %v240
    %v555 = vunpack.c.l.b16 %v241
    %v556 = vunpack.c.h.b16 %v241
    %v557 = vunpack.c.l.b16 %v242
    %v558 = vunpack.c.h.b16 %v242
    %v559 = vunpack.c.l.b16 %v243
    %v560 = vunpack.c.h.b16 %v243
    %v561 = vunpack.c.l.b16 %v244
    %v562 = vunpack.c.h.b16 %v244
    %v563 = vpack.c.b16 %v373, %v371
    %v564 = vpack.c.b16 %v374, %v372
    %v565 = vpack.c.b16 %v377, %v375
    %v566 = vpack.c.b16 %v378, %v376
    %v567 = vpack.c.b16 %v381, %v379
    %v568 = vpack.c.b16 %v382, %v380
    %v569 = vpack.c.b16 %v385, %v383
    %v570 = vpack.c.b16 %v386, %v384
    %v571 = vpack.c.b16 %v389, %v387
    %v572 = vpack.c.b16 %v390, %v388
    %v573 = vpack.c.b16 %v393, %v391
    %v574 = vpack.c.b16 %v394, %v392
    %v575 = vpack.c.b16 %v397, %v395
    %v576 = vpack.c.b16 %v398, %v396
    %v577 = vpack.c.b16 %v401, %v399
    %v578 = vpack.c.b16 %v402, %v400
    %v579 = vpack.c.b16 %v405, %v403
    %v580 = vpack.c.b16 %v406, %v404
    %v581 = vpack.c.b16 %v409, %v407
    %v582 = vpack.c.b16 %v410, %v408
    %v583 = vpack.c.b16 %v413, %v411
    %v584 = vpack.c.b16 %v414, %v412
    %v585 = vpack.c.b16 %v417, %v415
    %v586 = vpack.c.b16 %v418, %v416
    %v587 = vpack.c.b16 %v421, %v419
    %v588 = vpack.c.b16 %v422, %v420
    %v589 = vpack.c.b16 %v425, %v423
    %v590 = vpack.c.b16 %v426, %v424
    %v591 = vpack.c.b16 %v429, %v427
    %v592 = vpack.c.b16 %v430, %v428
    %v593 = vpack.c.b16 %v433, %v431
    %v594 = vpack.c.b16 %v434, %v432
    %v595 = vpack.c.b16 %v437, %v435
    %v596 = vpack.c.b16 %v438, %v436
    %v597 = vpack.c.b16 %v441, %v439
    %v598 = vpack.c.b16 %v442, %v440
    %v599 = vpack.c.b16 %v445, %v443
    %v600 = vpack.c.b16 %v446, %v444
    %v601 = vpack.c.b16 %v449, %v447
    %v602 = vpack.c.b16 %v450, %v448
    %v603 = vpack.c.b16 %v453, %v451
    %v604 = vpack.c.b16 %v454, %v452
    %v605 = vpack.c.b16 %v457, %v455
    %v606 = vpack.c.b16 %v458, %v456
    %v607 = vpack.c.b16 %v461, %v459
    %v608 = vpack.c.b16 %v462, %v460
    %v609 = vpack.c.b16 %v465, %v463
    %v610 = vpack.c.b16 %v466, %v464
    %v611 = vpack.c.b16 %v469, %v467
    %v612 = vpack.c.b16 %v470, %v468
    %v613 = vpack.c.b16 %v473, %v471
    %v614 = vpack.c.b16 %v474, %v472
    %v615 = vpack.c.b16 %v477, %v475
    %v616 = vpack.c.b16 %v478, %v476
    %v617 = vpack.c.b16 %v481, %v479
    %v618 = vpack.c.b16 %v482, %v480
    %v619 = vpack.c.b16 %v485, %v483
    %v620 = vpack.c.b16 %v486, %v484
    %v621 = vpack.c.b16 %v489, %v487
    %v622 = vpack.c.b16 %v490, %v488
    %v623 = vpack.c.b16 %v493, %v491
    %v624 = vpack.c.b16 %v494, %v492
    %v625 = vpack.c.b16 %v497, %v495
    %v626 = vpack.c.b16 %v498, %v496
    %v627 = vpack.c.b16 %v501, %v499
    %v628 = vpack.c.b16 %v502, %v500
    %v629 = vpack.c.b16 %v505, %v503
    %v630 = vpack.c.b16 %v506, %v504
    %v631 = vpack.c.b16 %v509, %v507
    %v632 = vpack.c.b16 %v510, %v508
    %v633 = vpack.c.b16 %v513, %v511
    %v634 = vpack.c.b16 %v514, %v512
    %v635 = vpack.c.b16 %v517, %v515
    %v636 = vpack.c.b16 %v518, %v516
    %v637 = vpack.c.b16 %v521, %v519
    %v638 = vpack.c.b16 %v522, %v520
    %v639 = vpack.c.b16 %v525, %v523
    %v640 = vpack.c.b16 %v526, %v524
    %v641 = vpack.c.b16 %v529, %v527
    %v642 = vpack.c.b16 %v530, %v528
    %v643 = vpack.c.b16 %v533, %v531
    %v644 = vpack.c.b16 %v534, %v532
    %v645 = vpack.c.b16 %v537, %v535
    %v646 = vpack.c.b16 %v538, %v536
    %v647 = vpack.c.b16 %v541, %v539
    %v648 = vpack.c.b16 %v542, %v540
    %v649 = vpack.c.b16 %v545, %v543
    %v650 = vpack.c.b16 %v546, %v544
    %v651 = vpack.c.b16 %v549, %v547
    %v652 = vpack.c.b16 %v550, %v548
    %v653 = vpack.c.b16 %v553, %v551
    %v654 = vpack.c.b16 %v554, %v552
    %v655 = vpack.c.b16 %v557, %v555
    %v656 = vpack.c.b16 %v558, %v556
    %v657 = vpack.c.b16 %v561, %v559
    %v658 = vpack.c.b16 %v562, %v560
    %755 = vmatprep.subr.bf16.mxu0 %v564
    %756 = vmatpush1.bf16.msra.mxu0 %v563
    %757 = vmatprep.subr.bf16.mxu0 %v566
    %758 = vmatpush1.bf16.msra.mxu0 %v565
    %759 = vmatprep.subr.bf16.mxu0 %v568
    %760 = vmatpush1.bf16.msra.mxu0 %v567
    %761 = vmatprep.subr.bf16.mxu0 %v570
    %762 = vmatpush1.bf16.msra.mxu0 %v569
    %763 = vmatprep.subr.bf16.mxu0 %v572
    %764 = vmatpush1.bf16.msra.mxu0 %v571
    %765 = vmatprep.subr.bf16.mxu0 %v574
    %766 = vmatpush1.bf16.msra.mxu0 %v573
    %767 = vmatprep.subr.bf16.mxu0 %v576
    %768 = vmatpush1.bf16.msra.mxu0 %v575
    %769 = vmatprep.subr.bf16.mxu0 %v578
    %770 = vmatpush1.bf16.msra.mxu0 %v577
    %771 = vmatprep.subr.bf16.mxu0 %v580
    %772 = vmatpush1.bf16.msra.mxu0 %v579
    %773 = vmatprep.subr.bf16.mxu0 %v582
    %774 = vmatpush1.bf16.msra.mxu0 %v581
    %775 = vmatprep.subr.bf16.mxu0 %v584
    %776 = vmatpush1.bf16.msra.mxu0 %v583
    %777 = vmatprep.subr.bf16.mxu0 %v586
    %778 = vmatpush1.bf16.msra.mxu0 %v585
    %779 = vmatprep.subr.bf16.mxu0 %v588
    %780 = vmatpush1.bf16.msra.mxu0 %v587
    %781 = vmatprep.subr.bf16.mxu0 %v590
    %782 = vmatpush1.bf16.msra.mxu0 %v589
    %783 = vmatprep.subr.bf16.mxu0 %v592
    %784 = vmatpush1.bf16.msra.mxu0 %v591
    %785 = vmatprep.subr.bf16.mxu0 %v594
    %786 = vmatpush1.bf16.msra.mxu0 %v593
    %787 = vmatprep.mubr.bf16.mxu0 %v264
    %788 = vmatmul.mubr.bf16.gmra.mrb[0].mxu0 %v263
    %v789 = vpop.f32.mrb[0].mxu0
    %v790 = vadd.f32 0.0, %v789
    %v791 = vpop.f32.mrb[0].mxu0
    %v792 = vadd.f32 0.0, %v791
    %v793 = vpop.f32.mrb[0].mxu0
    %v794 = vadd.f32 0.0, %v793
    %v795 = vpop.f32.mrb[0].mxu0
    %v796 = vadd.f32 0.0, %v795
    %797 = vdwg.mxu0
    %798 = vmatprep.subr.bf16.mxu0 %v596
    %799 = vmatpush1.bf16.msra.mxu0 %v595
    %800 = vmatprep.subr.bf16.mxu0 %v598
    %801 = vmatpush1.bf16.msra.mxu0 %v597
    %802 = vmatprep.subr.bf16.mxu0 %v600
    %803 = vmatpush1.bf16.msra.mxu0 %v599
    %804 = vmatprep.subr.bf16.mxu0 %v602
    %805 = vmatpush1.bf16.msra.mxu0 %v601
    %806 = vmatprep.subr.bf16.mxu0 %v604
    %807 = vmatpush1.bf16.msra.mxu0 %v603
    %808 = vmatprep.subr.bf16.mxu0 %v606
    %809 = vmatpush1.bf16.msra.mxu0 %v605
    %810 = vmatprep.subr.bf16.mxu0 %v608
    %811 = vmatpush1.bf16.msra.mxu0 %v607
    %812 = vmatprep.subr.bf16.mxu0 %v610
    %813 = vmatpush1.bf16.msra.mxu0 %v609
    %814 = vmatprep.subr.bf16.mxu0 %v612
    %815 = vmatpush1.bf16.msra.mxu0 %v611
    %816 = vmatprep.subr.bf16.mxu0 %v614
    %817 = vmatpush1.bf16.msra.mxu0 %v613
    %818 = vmatprep.subr.bf16.mxu0 %v616
    %819 = vmatpush1.bf16.msra.mxu0 %v615
    %820 = vmatprep.subr.bf16.mxu0 %v618
    %821 = vmatpush1.bf16.msra.mxu0 %v617
    %822 = vmatprep.subr.bf16.mxu0 %v620
    %823 = vmatpush1.bf16.msra.mxu0 %v619
    %824 = vmatprep.subr.bf16.mxu0 %v622
    %825 = vmatpush1.bf16.msra.mxu0 %v621
    %826 = vmatprep.subr.bf16.mxu0 %v624
    %827 = vmatpush1.bf16.msra.mxu0 %v623
    %828 = vmatprep.subr.bf16.mxu0 %v626
    %829 = vmatpush1.bf16.msra.mxu0 %v625
    %830 = vmatprep.mubr.bf16.mxu0 %v266
    %831 = vmatmul.mubr.bf16.gmra.mrb[0].mxu0 %v265
    %v832 = vpop.f32.mrb[0].mxu0
    %v833 = vadd.f32 %v790, %v832
    %v834 = vpop.f32.mrb[0].mxu0
    %v835 = vadd.f32 %v792, %v834
    %v836 = vpop.f32.mrb[0].mxu0
    %v837 = vadd.f32 %v794, %v836
    %v838 = vpop.f32.mrb[0].mxu0
    %v839 = vadd.f32 %v796, %v838
    %840 = vdwg.mxu0
    %841 = vmatprep.subr.bf16.mxu0 %v628
    %842 = vmatpush1.bf16.msra.mxu0 %v627
    %843 = vmatprep.subr.bf16.mxu0 %v630
    %844 = vmatpush1.bf16.msra.mxu0 %v629
    %845 = vmatprep.subr.bf16.mxu0 %v632
    %846 = vmatpush1.bf16.msra.mxu0 %v631
    %847 = vmatprep.subr.bf16.mxu0 %v634
    %848 = vmatpush1.bf16.msra.mxu0 %v633
    %849 = vmatprep.subr.bf16.mxu0 %v636
    %850 = vmatpush1.bf16.msra.mxu0 %v635
    %851 = vmatprep.subr.bf16.mxu0 %v638
    %852 = vmatpush1.bf16.msra.mxu0 %v637
    %853 = vmatprep.subr.bf16.mxu0 %v640
    %854 = vmatpush1.bf16.msra.mxu0 %v639
    %855 = vmatprep.subr.bf16.mxu0 %v642
    %856 = vmatpush1.bf16.msra.mxu0 %v641
    %857 = vmatprep.subr.bf16.mxu0 %v644
    %858 = vmatpush1.bf16.msra.mxu0 %v643
    %859 = vmatprep.subr.bf16.mxu0 %v646
    %860 = vmatpush1.bf16.msra.mxu0 %v645
    %861 = vmatprep.subr.bf16.mxu0 %v648
    %862 = vmatpush1.bf16.msra.mxu0 %v647
    %863 = vmatprep.subr.bf16.mxu0 %v650
    %864 = vmatpush1.bf16.msra.mxu0 %v649
    %865 = vmatprep.subr.bf16.mxu0 %v652
    %866 = vmatpush1.bf16.msra.mxu0 %v651
    %867 = vmatprep.subr.bf16.mxu0 %v654
    %868 = vmatpush1.bf16.msra.mxu0 %v653
    %869 = vmatprep.subr.bf16.mxu0 %v656
    %870 = vmatpush1.bf16.msra.mxu0 %v655
    %871 = vmatprep.subr.bf16.mxu0 %v658
    %872 = vmatpush1.bf16.msra.mxu0 %v657
    %873 = vmatprep.mubr.bf16.mxu0 %v268
    %874 = vmatmul.mubr.bf16.gmra.mrb[0].mxu0 %v267
    %v875 = vpop.f32.mrb[0].mxu0
    %v876 = vadd.f32 %v833, %v875
    %v877 = vpop.f32.mrb[0].mxu0
    %v878 = vadd.f32 %v835, %v877
    %v879 = vpop.f32.mrb[0].mxu0
    %v880 = vadd.f32 %v837, %v879
    %v881 = vpop.f32.mrb[0].mxu0
    %v882 = vadd.f32 %v839, %v881
    %883 = vdwg.mxu0
    %v884 = vld [vmem:[%s1] sm:$0x3]
    %v885 = vld [vmem:[%s7] sm:$0xff]
    %v886 = vld [vmem:[%s7 + $0x8] sm:$0xff]
    %v887 = vld [vmem:[%s7 + $0x10] sm:$0xff]
    %v888 = vld [vmem:[%s7 + $0x18] sm:$0xff]
    %v889 = vld [vmem:[%s7 + $0x20] sm:$0xff]
    %v890 = vld [vmem:[%s7 + $0x28] sm:$0xff]
    %v891 = vld [vmem:[%s7 + $0x30] sm:$0xff]
    %v892 = vld [vmem:[%s7 + $0x38] sm:$0xff]
    %v893 = vld [vmem:[%s7 + $0x40] sm:$0xff]
    %v894 = vld [vmem:[%s7 + $0x48] sm:$0xff]
    %v895 = vld [vmem:[%s7 + $0x50] sm:$0xff]
    %v896 = vld [vmem:[%s7 + $0x58] sm:$0xff]
    %v897 = vld [vmem:[%s7 + $0x60] sm:$0xff]
    %v898 = vld [vmem:[%s7 + $0x68] sm:$0xff]
    %v899 = vld [vmem:[%s7 + $0x70] sm:$0xff]
    %v900 = vld [vmem:[%s7 + $0x78] sm:$0xff]
    %901 = vmatprep.subr.mxu0 0.0
    %902 = vmatpush1.msra.mxu0 %v885
    %903 = vmatprep.subr.mxu0 0.0
    %904 = vmatpush1.msra.mxu0 %v886
    %905 = vmatprep.subr.mxu0 0.0
    %906 = vmatpush1.msra.mxu0 %v887
    %907 = vmatprep.subr.mxu0 0.0
    %908 = vmatpush1.msra.mxu0 %v888
    %909 = vmatprep.subr.mxu0 0.0
    %910 = vmatpush1.msra.mxu0 %v889
    %911 = vmatprep.subr.mxu0 0.0
    %912 = vmatpush1.msra.mxu0 %v890
    %913 = vmatprep.subr.mxu0 0.0
    %914 = vmatpush1.msra.mxu0 %v891
    %915 = vmatprep.subr.mxu0 0.0
    %916 = vmatpush1.msra.mxu0 %v892
    %917 = vmatprep.subr.mxu0 0.0
    %918 = vmatpush1.msra.mxu0 %v893
    %919 = vmatprep.subr.mxu0 0.0
    %920 = vmatpush1.msra.mxu0 %v894
    %921 = vmatprep.subr.mxu0 0.0
    %922 = vmatpush1.msra.mxu0 %v895
    %923 = vmatprep.subr.mxu0 0.0
    %924 = vmatpush1.msra.mxu0 %v896
    %925 = vmatprep.subr.mxu0 0.0
    %926 = vmatpush1.msra.mxu0 %v897
    %927 = vmatprep.subr.mxu0 0.0
    %928 = vmatpush1.msra.mxu0 %v898
    %929 = vmatprep.subr.mxu0 0.0
    %930 = vmatpush1.msra.mxu0 %v899
    %931 = vmatprep.subr.mxu0 0.0
    %932 = vmatpush1.msra.mxu0 %v900
    %933 = vmatprep.subr.mxu0 0.0
    %934 = vmatpush1.msra.mxu0 0.0
    %935 = vmatprep.subr.mxu0 0.0
    %936 = vmatpush1.msra.mxu0 0.0
    %937 = vmatprep.subr.mxu0 0.0
    %938 = vmatpush1.msra.mxu0 0.0
    %939 = vmatprep.subr.mxu0 0.0
    %940 = vmatpush1.msra.mxu0 0.0
    %941 = vmatprep.subr.mxu0 0.0
    %942 = vmatpush1.msra.mxu0 0.0
    %943 = vmatprep.subr.mxu0 0.0
    %944 = vmatpush1.msra.mxu0 0.0
    %945 = vmatprep.subr.mxu0 0.0
    %946 = vmatpush1.msra.mxu0 0.0
    %947 = vmatprep.subr.mxu0 0.0
    %948 = vmatpush1.msra.mxu0 0.0
    %949 = vmatprep.subr.mxu0 0.0
    %950 = vmatpush1.msra.mxu0 0.0
    %951 = vmatprep.subr.mxu0 0.0
    %952 = vmatpush1.msra.mxu0 0.0
    %953 = vmatprep.subr.mxu0 0.0
    %954 = vmatpush1.msra.mxu0 0.0
    %955 = vmatprep.subr.mxu0 0.0
    %956 = vmatpush1.msra.mxu0 0.0
    %957 = vmatprep.subr.mxu0 0.0
    %958 = vmatpush1.msra.mxu0 0.0
    %959 = vmatprep.subr.mxu0 0.0
    %960 = vmatpush1.msra.mxu0 0.0
    %961 = vmatprep.subr.mxu0 0.0
    %962 = vmatpush1.msra.mxu0 0.0
    %963 = vmatprep.subr.mxu0 0.0
    %964 = vmatpush1.msra.mxu0 0.0
    %965 = vmatprep.mubr.f32.mxu0 0.0
    %966 = vmatmul.mubr.f32.gmra.mrb[0].mxu0 %v884
    %v967 = vpop.f32.mrb[0].mxu0
    %v968 = vadd.f32 0.0, %v967
    %v969 = vpop.f32.mrb[0].mxu0
    %970 = vdwg.mxu0
    %v973 = vunpack.c.l.s4 1966171168
    %v974 = vunpack.c.0.s8 %v973
    %v975 = vlaneseq
    %v976 = vshrl.u32 %v975, 7
    %v977 = vsub.s32 %v974, %v976
    %v978 = vrot.slane %v968, %v977
    %v979 = vcombine.high %v978, %v978
    %v981 = vunpack.c.l.s4 1966171168
    %v982 = vunpack.c.0.s8 %v981
    %v983 = vlaneseq
    %v984 = vshrl.u32 %v983, 7
    %v985 = vsub.s32 %v982, %v984
    %v986 = vrot.slane %v978, %v985
    %v988 = vunpack.c.l.s4 1966171168
    %v989 = vunpack.c.0.s8 %v988
    %v990 = vlaneseq
    %v991 = vshrl.u32 %v990, 7
    %v992 = vsub.s32 %v989, %v991
    %v993 = vrot.slane %v979, %v992
    %v994 = vlaneseq
    %v995 = vshrl.u32 %v994, 7
    %v996 = vsub.s32 0, %v995
    %v997 = vrot.slane %v986, %v996
    %v998 = vlaneseq
    %v999 = vshrl.u32 %v998, 7
    %v1000 = vsub.s32 0, %v999
    %v1001 = vrot.slane %v993, %v1000
    %v1004 = vmul.f32 %v876, %v997
    %v1005 = vmul.f32 %v880, %v1001
    %1006 = vadd.xlane.f32.xlu0 %v1004
    %v1007 = vpop.xlane.xlu0 %1006
    %1008 = vadd.xlane.f32.xlu0 %v1005
    %v1009 = vpop.xlane.xlu0 %1008
    %v1010 = vmul.f32 %v1007, 0.088388346
    %v1011 = vmul.f32 %v1009, 0.088388346
    %v1012 = vld [vmem:[%s2] sm:$0x3]
    %v1014 = vlaneseq
    %v1015 = vshrl.u32 %v1014, 7
    %v1016 = vsub.s32 0, %v1015
    %v1017 = vrot.slane %v1012, %v1016
    %1019 = vbcast.lane.b32.xlu0 %v1017, 256
    %v1020 = vpop.permute.xlu0 %1019
    %v1021 = vlaneseq
    %v1022 = vshrl.u32 %v1021, 7
    %v1023 = vsub.s32 1, %v1022
    %v1024 = vrot.slane %v1012, %v1023
    %1026 = vbcast.lane.b32.xlu0 %v1024, 256
    %v1027 = vpop.permute.xlu0 %1026
    %v1030 = vadd.f32 %v1010, %v1020
    %v1031 = vadd.f32 %v1011, %v1027
    %1034 = vset.pattern.permute.xlu0 0
    %1035 = vperm.xlu0 %1034, %v1030
    %v1036 = vpop.permute.xlu0 %1035
    %1037 = vset.pattern.permute.xlu0 0
    %1038 = vperm.xlu0 %1037, %v1031
    %v1039 = vpop.permute.xlu0 %1038
    %v1040 = vlaneseq
    %v1041 = vand.u32 %v1040, 127
    %v1042 = vlaneseq
    %v1043 = vshrl.u32 %v1042, 7
    %v1044 = vsub.s32 %v1041, %v1043
    %v1045 = vrot.slane %v1036, %v1044
    %v1046 = vlaneseq
    %v1047 = vshrl.u32 %v1046, 7
    %v1048 = vsub.s32 %v1041, %v1047
    %v1049 = vrot.slane %v1039, %v1048
    %vm1050 = vcmask 1041409
    %v1051 = vsel %vm1050, %v1049, %v1045
    %vm1053 = vcmask 58368
    %v1054 = vsel %vm1053, %v1051, -inf
    %1055 = vmax.xlane.f32.xlu0 %v1054
    %v1056 = vpop.xlane.xlu0 %1055
    %v1058 = vlaneseq
    %v1059 = vshrl.u32 %v1058, 7
    %v1060 = vsub.s32 0, %v1059
    %v1061 = vrot.slane %v1056, %v1060
    %v1062 = vlaneseq
    %v1063 = vshrl.u32 %v1062, 7
    %v1064 = vsub.s32 1, %v1063
    %v1065 = vrot.slane %v1056, %v1064
    %v1068 = vsub.f32 %v1030, %v1061
    %v1069 = vsub.f32 %v1031, %v1065
    %v1070 = vmul.f32 %v1068, 1.442695
    %v1071 = vpow.pop %v1070
    %v1072 = vmul.f32 %v1069, 1.442695
    %v1073 = vpow.pop %v1072
    %1076 = vset.pattern.permute.xlu0 0
    %1077 = vperm.xlu0 %1076, %v1071
    %v1078 = vpop.permute.xlu0 %1077
    %1079 = vset.pattern.permute.xlu0 0
    %1080 = vperm.xlu0 %1079, %v1073
    %v1081 = vpop.permute.xlu0 %1080
    %v1082 = vlaneseq
    %v1083 = vshrl.u32 %v1082, 7
    %v1084 = vsub.s32 %v1041, %v1083
    %v1085 = vrot.slane %v1078, %v1084
    %v1086 = vlaneseq
    %v1087 = vshrl.u32 %v1086, 7
    %v1088 = vsub.s32 %v1041, %v1087
    %v1089 = vrot.slane %v1081, %v1088
    %v1090 = vsel %vm1050, %v1089, %v1085
    %v1092 = vsel %vm1053, %v1090, 0.0
    %1093 = vadd.xlane.f32.xlu0 %v1092
    %v1094 = vpop.xlane.xlu0 %1093
    %v1096 = vlaneseq
    %v1097 = vshrl.u32 %v1096, 7
    %v1098 = vsub.s32 0, %v1097
    %v1099 = vrot.slane %v1094, %v1098
    %v1100 = vlaneseq
    %v1101 = vshrl.u32 %v1100, 7
    %v1102 = vsub.s32 1, %v1101
    %v1103 = vrot.slane %v1094, %v1102
    %v1106 = vrcp.pop %v1099
    %v1107 = vmul.f32 %v1071, %v1106
    %v1108 = vrcp.pop %v1103
    %v1109 = vmul.f32 %v1073, %v1108
    %1111 = vset.pattern.permute.xlu0 0
    %1112 = vperm.xlu0 %1111, %v1107
    %v1113 = vpop.permute.xlu0 %1112
    %1116 = vset.pattern.permute.xlu0 0
    %1117 = vperm.xlu0 %1116, %v1109
    %v1118 = vpop.permute.xlu0 %1117
    %v1120 = vmul.f32 %v878, %v1113
    %v1121 = vmul.f32 %v882, %v1118
    %v1122 = vrot.slane %v1120, 4
    %v1123 = vadd.f32 %v1120, %v1122
    %v1124 = vrot.slane %v1123, 2
    %v1125 = vadd.f32 %v1123, %v1124
    %v1126 = vrot.slane %v1125, 1
    %v1127 = vadd.f32 %v1125, %v1126
    %v1128 = vrot.slane %v1121, 4
    %v1129 = vadd.f32 %v1121, %v1128
    %v1130 = vrot.slane %v1129, 2
    %v1131 = vadd.f32 %v1129, %v1130
    %v1132 = vrot.slane %v1131, 1
    %v1133 = vadd.f32 %v1131, %v1132
    %v1134 = vld [vmem:[#allocation5] sm:$0xff]
    %v1135 = vld [vmem:[#allocation5 + $0x8] sm:$0xff]
    %v1136 = vld [vmem:[#allocation5 + $0x10] sm:$0xff]
    %v1137 = vld [vmem:[#allocation5 + $0x18] sm:$0xff]
    %v1138 = vld [vmem:[#allocation5 + $0x20] sm:$0xff]
    %v1139 = vld [vmem:[#allocation5 + $0x28] sm:$0xff]
    %v1140 = vld [vmem:[#allocation5 + $0x30] sm:$0xff]
    %v1141 = vld [vmem:[#allocation5 + $0x38] sm:$0xff]
    %v1142 = vld [vmem:[#allocation5 + $0x40] sm:$0xff]
    %v1143 = vld [vmem:[#allocation5 + $0x48] sm:$0xff]
    %v1144 = vld [vmem:[#allocation5 + $0x50] sm:$0xff]
    %v1145 = vld [vmem:[#allocation5 + $0x58] sm:$0xff]
    %v1146 = vld [vmem:[#allocation5 + $0x60] sm:$0xff]
    %v1147 = vld [vmem:[#allocation5 + $0x68] sm:$0xff]
    %v1148 = vld [vmem:[#allocation5 + $0x70] sm:$0xff]
    %v1149 = vld [vmem:[#allocation5 + $0x78] sm:$0xff]
    %v1150 = vld [vmem:[#allocation7] sm:$0xff]
    %v1151 = vld [vmem:[#allocation7 + $0x8] sm:$0xff]
    %v1152 = vld [vmem:[#allocation7 + $0x10] sm:$0xff]
    %v1153 = vld [vmem:[#allocation7 + $0x18] sm:$0xff]
    %v1154 = vld [vmem:[#allocation7 + $0x20] sm:$0xff]
    %v1155 = vld [vmem:[#allocation7 + $0x28] sm:$0xff]
    %v1156 = vld [vmem:[#allocation7 + $0x30] sm:$0xff]
    %v1157 = vld [vmem:[#allocation7 + $0x38] sm:$0xff]
    %v1158 = vld [vmem:[#allocation7 + $0x40] sm:$0xff]
    %v1159 = vld [vmem:[#allocation7 + $0x48] sm:$0xff]
    %v1160 = vld [vmem:[#allocation7 + $0x50] sm:$0xff]
    %v1161 = vld [vmem:[#allocation7 + $0x58] sm:$0xff]
    %v1162 = vld [vmem:[#allocation7 + $0x60] sm:$0xff]
    %v1163 = vld [vmem:[#allocation7 + $0x68] sm:$0xff]
    %v1164 = vld [vmem:[#allocation7 + $0x70] sm:$0xff]
    %v1165 = vld [vmem:[#allocation7 + $0x78] sm:$0xff]
    %1166 = vmatprep.subr.mxu0 0.0
    %1167 = vmatpush1.msra.mxu0 %v1150
    %1168 = vmatprep.subr.mxu0 0.0
    %1169 = vmatpush1.msra.mxu0 %v1151
    %1170 = vmatprep.subr.mxu0 0.0
    %1171 = vmatpush1.msra.mxu0 %v1152
    %1172 = vmatprep.subr.mxu0 0.0
    %1173 = vmatpush1.msra.mxu0 %v1153
    %1174 = vmatprep.subr.mxu0 0.0
    %1175 = vmatpush1.msra.mxu0 %v1154
    %1176 = vmatprep.subr.mxu0 0.0
    %1177 = vmatpush1.msra.mxu0 %v1155
    %1178 = vmatprep.subr.mxu0 0.0
    %1179 = vmatpush1.msra.mxu0 %v1156
    %1180 = vmatprep.subr.mxu0 0.0
    %1181 = vmatpush1.msra.mxu0 %v1157
    %1182 = vmatprep.subr.mxu0 0.0
    %1183 = vmatpush1.msra.mxu0 %v1158
    %1184 = vmatprep.subr.mxu0 0.0
    %1185 = vmatpush1.msra.mxu0 %v1159
    %1186 = vmatprep.subr.mxu0 0.0
    %1187 = vmatpush1.msra.mxu0 %v1160
    %1188 = vmatprep.subr.mxu0 0.0
    %1189 = vmatpush1.msra.mxu0 %v1161
    %1190 = vmatprep.subr.mxu0 0.0
    %1191 = vmatpush1.msra.mxu0 %v1162
    %1192 = vmatprep.subr.mxu0 0.0
    %1193 = vmatpush1.msra.mxu0 %v1163
    %1194 = vmatprep.subr.mxu0 0.0
    %1195 = vmatpush1.msra.mxu0 %v1164
    %1196 = vmatprep.subr.mxu0 0.0
    %1197 = vmatpush1.msra.mxu0 %v1165
    %1198 = vmatprep.subr.mxu0 0.0
    %1199 = vmatpush1.msra.mxu0 0.0
    %1200 = vmatprep.subr.mxu0 0.0
    %1201 = vmatpush1.msra.mxu0 0.0
    %1202 = vmatprep.subr.mxu0 0.0
    %1203 = vmatpush1.msra.mxu0 0.0
    %1204 = vmatprep.subr.mxu0 0.0
    %1205 = vmatpush1.msra.mxu0 0.0
    %1206 = vmatprep.subr.mxu0 0.0
    %1207 = vmatpush1.msra.mxu0 0.0
    %1208 = vmatprep.subr.mxu0 0.0
    %1209 = vmatpush1.msra.mxu0 0.0
    %1210 = vmatprep.subr.mxu0 0.0
    %1211 = vmatpush1.msra.mxu0 0.0
    %1212 = vmatprep.subr.mxu0 0.0
    %1213 = vmatpush1.msra.mxu0 0.0
    %1214 = vmatprep.subr.mxu0 0.0
    %1215 = vmatpush1.msra.mxu0 0.0
    %1216 = vmatprep.subr.mxu0 0.0
    %1217 = vmatpush1.msra.mxu0 0.0
    %1218 = vmatprep.subr.mxu0 0.0
    %1219 = vmatpush1.msra.mxu0 0.0
    %1220 = vmatprep.subr.mxu0 0.0
    %1221 = vmatpush1.msra.mxu0 0.0
    %1222 = vmatprep.subr.mxu0 0.0
    %1223 = vmatpush1.msra.mxu0 0.0
    %1224 = vmatprep.subr.mxu0 0.0
    %1225 = vmatpush1.msra.mxu0 0.0
    %1226 = vmatprep.subr.mxu0 0.0
    %1227 = vmatpush1.msra.mxu0 0.0
    %1228 = vmatprep.subr.mxu0 0.0
    %1229 = vmatpush1.msra.mxu0 0.0
    %1230 = vmatprep.mubr.f32.mxu0 0.0
    %1231 = vmatmul.mubr.f32.gmra.mrb[0].mxu0 %v884
    %v1232 = vpop.f32.mrb[0].mxu0
    %v1233 = vadd.f32 0.0, %v1232
    %v1234 = vpop.f32.mrb[0].mxu0
    %1235 = vdwg.mxu0
    %v1238 = vsel %vm1050, %v1133, %v1127
    %1240 = vmatprep.subr.mxu0 0.0
    %1241 = vmatpush1.msra.mxu0 %v1134
    %1242 = vmatprep.subr.mxu0 0.0
    %1243 = vmatpush1.msra.mxu0 %v1135
    %1244 = vmatprep.subr.mxu0 0.0
    %1245 = vmatpush1.msra.mxu0 %v1136
    %1246 = vmatprep.subr.mxu0 0.0
    %1247 = vmatpush1.msra.mxu0 %v1137
    %1248 = vmatprep.subr.mxu0 0.0
    %1249 = vmatpush1.msra.mxu0 %v1138
    %1250 = vmatprep.subr.mxu0 0.0
    %1251 = vmatpush1.msra.mxu0 %v1139
    %1252 = vmatprep.subr.mxu0 0.0
    %1253 = vmatpush1.msra.mxu0 %v1140
    %1254 = vmatprep.subr.mxu0 0.0
    %1255 = vmatpush1.msra.mxu0 %v1141
    %1256 = vmatprep.subr.mxu0 0.0
    %1257 = vmatpush1.msra.mxu0 %v1142
    %1258 = vmatprep.subr.mxu0 0.0
    %1259 = vmatpush1.msra.mxu0 %v1143
    %1260 = vmatprep.subr.mxu0 0.0
    %1261 = vmatpush1.msra.mxu0 %v1144
    %1262 = vmatprep.subr.mxu0 0.0
    %1263 = vmatpush1.msra.mxu0 %v1145
    %1264 = vmatprep.subr.mxu0 0.0
    %1265 = vmatpush1.msra.mxu0 %v1146
    %1266 = vmatprep.subr.mxu0 0.0
    %1267 = vmatpush1.msra.mxu0 %v1147
    %1268 = vmatprep.subr.mxu0 0.0
    %1269 = vmatpush1.msra.mxu0 %v1148
    %1270 = vmatprep.subr.mxu0 0.0
    %1271 = vmatpush1.msra.mxu0 %v1149
    %1272 = vmatprep.subr.mxu0 0.0
    %1273 = vmatpush1.msra.mxu0 0.0
    %1274 = vmatprep.subr.mxu0 0.0
    %1275 = vmatpush1.msra.mxu0 0.0
    %1276 = vmatprep.subr.mxu0 0.0
    %1277 = vmatpush1.msra.mxu0 0.0
    %1278 = vmatprep.subr.mxu0 0.0
    %1279 = vmatpush1.msra.mxu0 0.0
    %1280 = vmatprep.subr.mxu0 0.0
    %1281 = vmatpush1.msra.mxu0 0.0
    %1282 = vmatprep.subr.mxu0 0.0
    %1283 = vmatpush1.msra.mxu0 0.0
    %1284 = vmatprep.subr.mxu0 0.0
    %1285 = vmatpush1.msra.mxu0 0.0
    %1286 = vmatprep.subr.mxu0 0.0
    %1287 = vmatpush1.msra.mxu0 0.0
    %1288 = vmatprep.subr.mxu0 0.0
    %1289 = vmatpush1.msra.mxu0 0.0
    %1290 = vmatprep.subr.mxu0 0.0
    %1291 = vmatpush1.msra.mxu0 0.0
    %1292 = vmatprep.subr.mxu0 0.0
    %1293 = vmatpush1.msra.mxu0 0.0
    %1294 = vmatprep.subr.mxu0 0.0
    %1295 = vmatpush1.msra.mxu0 0.0
    %1296 = vmatprep.subr.mxu0 0.0
    %1297 = vmatpush1.msra.mxu0 0.0
    %1298 = vmatprep.subr.mxu0 0.0
    %1299 = vmatpush1.msra.mxu0 0.0
    %1300 = vmatprep.subr.mxu0 0.0
    %1301 = vmatpush1.msra.mxu0 0.0
    %1302 = vmatprep.subr.mxu0 0.0
    %1303 = vmatpush1.msra.mxu0 0.0
    %1304 = vmatprep.mubr.f32.mxu0 0.0
    %1305 = vmatmul.mubr.f32.gmra.mrb[0].mxu0 %v1238
    %v1306 = vpop.f32.mrb[0].mxu0
    %v1307 = vadd.f32 %v1233, %v1306
    %v1308 = vpop.f32.mrb[0].mxu0
    %1309 = vdwg.mxu0
    %v1310 = vld [vmem:[%s3] sm:$0x3]
    %v1311 = vld [vmem:[%s10] sm:$0xff]
    %v1312 = vld [vmem:[%s10 + $0x8] sm:$0xff]
    %v1313 = vld [vmem:[%s10 + $0x10] sm:$0xff]
    %v1314 = vld [vmem:[%s10 + $0x18] sm:$0xff]
    %vm1315 = vcmask 261120
    %v1317 = vsel %vm1315, %v1310, 0
    %1319 = vmatprep.subr.mxu0 0.0
    %1320 = vmatpush1.msra.mxu0 %v1311
    %1321 = vmatprep.subr.mxu0 0.0
    %1322 = vmatpush1.msra.mxu0 %v1312
    %1323 = vmatprep.subr.mxu0 0.0
    %1324 = vmatpush1.msra.mxu0 %v1313
    %1325 = vmatprep.subr.mxu0 0.0
    %1326 = vmatpush1.msra.mxu0 %v1314
    %1327 = vmatprep.subr.mxu0 0.0
    %1328 = vmatpush1.msra.mxu0 0.0
    %1329 = vmatprep.subr.mxu0 0.0
    %1330 = vmatpush1.msra.mxu0 0.0
    %1331 = vmatprep.subr.mxu0 0.0
    %1332 = vmatpush1.msra.mxu0 0.0
    %1333 = vmatprep.subr.mxu0 0.0
    %1334 = vmatpush1.msra.mxu0 0.0
    %1335 = vmatprep.subr.mxu0 0.0
    %1336 = vmatpush1.msra.mxu0 0.0
    %1337 = vmatprep.subr.mxu0 0.0
    %1338 = vmatpush1.msra.mxu0 0.0
    %1339 = vmatprep.subr.mxu0 0.0
    %1340 = vmatpush1.msra.mxu0 0.0
    %1341 = vmatprep.subr.mxu0 0.0
    %1342 = vmatpush1.msra.mxu0 0.0
    %1343 = vmatprep.subr.mxu0 0.0
    %1344 = vmatpush1.msra.mxu0 0.0
    %1345 = vmatprep.subr.mxu0 0.0
    %1346 = vmatpush1.msra.mxu0 0.0
    %1347 = vmatprep.subr.mxu0 0.0
    %1348 = vmatpush1.msra.mxu0 0.0
    %1349 = vmatprep.subr.mxu0 0.0
    %1350 = vmatpush1.msra.mxu0 0.0
    %1351 = vmatprep.subr.mxu0 0.0
    %1352 = vmatpush1.msra.mxu0 0.0
    %1353 = vmatprep.subr.mxu0 0.0
    %1354 = vmatpush1.msra.mxu0 0.0
    %1355 = vmatprep.subr.mxu0 0.0
    %1356 = vmatpush1.msra.mxu0 0.0
    %1357 = vmatprep.subr.mxu0 0.0
    %1358 = vmatpush1.msra.mxu0 0.0
    %1359 = vmatprep.subr.mxu0 0.0
    %1360 = vmatpush1.msra.mxu0 0.0
    %1361 = vmatprep.subr.mxu0 0.0
    %1362 = vmatpush1.msra.mxu0 0.0
    %1363 = vmatprep.subr.mxu0 0.0
    %1364 = vmatpush1.msra.mxu0 0.0
    %1365 = vmatprep.subr.mxu0 0.0
    %1366 = vmatpush1.msra.mxu0 0.0
    %1367 = vmatprep.subr.mxu0 0.0
    %1368 = vmatpush1.msra.mxu0 0.0
    %1369 = vmatprep.subr.mxu0 0.0
    %1370 = vmatpush1.msra.mxu0 0.0
    %1371 = vmatprep.subr.mxu0 0.0
    %1372 = vmatpush1.msra.mxu0 0.0
    %1373 = vmatprep.subr.mxu0 0.0
    %1374 = vmatpush1.msra.mxu0 0.0
    %1375 = vmatprep.subr.mxu0 0.0
    %1376 = vmatpush1.msra.mxu0 0.0
    %1377 = vmatprep.subr.mxu0 0.0
    %1378 = vmatpush1.msra.mxu0 0.0
    %1379 = vmatprep.subr.mxu0 0.0
    %1380 = vmatpush1.msra.mxu0 0.0
    %1381 = vmatprep.subr.mxu0 0.0
    %1382 = vmatpush1.msra.mxu0 0.0
    %1383 = vmatprep.mubr.f32.mxu0 0.0
    %1384 = vmatmul.mubr.f32.gmra.mrb[0].mxu0 %v1317
    %v1385 = vpop.f32.mrb[0].mxu0
    %v1386 = vadd.f32 0.0, %v1385
    %v1387 = vpop.f32.mrb[0].mxu0
    %1388 = vdwg.mxu0
    %v1389 = vadd.f32 %v1307, %v1386
    %v1390 = vld [vmem:[%s11] sm:$0x1]
    %v1392 = vlaneseq
    %v1393 = vshrl.u32 %v1392, 7
    %v1394 = vsub.s32 0, %v1393
    %v1395 = vrot.slane %v1390, %v1394
    %v1397 = vadd.f32 %v1389, %v1395
    %v1398 = vld [vmem:[%s4] sm:$0x3]
    %v1399 = vxor.u32 %v1397, 2147483648
    %v1400 = vmul.f32 %v1399, 1.442695
    %v1401 = vpow.pop %v1400
    %v1402 = vadd.f32 %v1401, 1.0
    %v1403 = vrcp.pop %v1402
    %v1404 = vmul.f32 1.0, %v1403
    %v1405 = vtanh.pop %v1397
    %1407 = vrot.lane.b32.xlu0 %v1398, 32
    %v1408 = vpop.permute.xlu0 %1407
    %v1410 = vmul.f32 %v1404, %v1408
    %1412 = vrot.lane.b32.xlu0 %v1405, 64
    %v1413 = vpop.permute.xlu0 %1412
    %v1415 = vmul.f32 %v1404, %v1413
    %1417 = vrot.lane.b32.xlu0 %v1415, 32
    %v1418 = vpop.permute.xlu0 %1417
    %v1420 = vadd.f32 %v1410, %v1418
    %v1421 = vtanh.pop %v1420
    %1423 = vrot.lane.b32.xlu0 %v1421, 64
    %v1424 = vpop.permute.xlu0 %1423
    %v1426 = vmul.f32 %v1404, %v1424
    %v1427 = vld [vmem:[#allocation8] sm:$0xff]
    %v1428 = vld [vmem:[#allocation8 + $0x8] sm:$0xff]
    %v1429 = vld [vmem:[#allocation8 + $0x10] sm:$0xff]
    %v1430 = vld [vmem:[#allocation8 + $0x18] sm:$0xff]
    %s1431 = scalar_lea.vmem %s3, 2
    %v1432 = vld [vmem:[%s1431] sm:$0x3]
    %v1433 = vld [vmem:[#allocation10] sm:$0xff]
    %v1434 = vld [vmem:[#allocation10 + $0x8] sm:$0xff]
    %v1435 = vld [vmem:[#allocation10 + $0x10] sm:$0xff]
    %v1436 = vld [vmem:[#allocation10 + $0x18] sm:$0xff]
    %v1438 = vsel %vm1315, %v1432, 0
    %1440 = vmatprep.subr.mxu0 0.0
    %1441 = vmatpush1.msra.mxu0 %v1433
    %1442 = vmatprep.subr.mxu0 0.0
    %1443 = vmatpush1.msra.mxu0 %v1434
    %1444 = vmatprep.subr.mxu0 0.0
    %1445 = vmatpush1.msra.mxu0 %v1435
    %1446 = vmatprep.subr.mxu0 0.0
    %1447 = vmatpush1.msra.mxu0 %v1436
    %1448 = vmatprep.subr.mxu0 0.0
    %1449 = vmatpush1.msra.mxu0 0.0
    %1450 = vmatprep.subr.mxu0 0.0
    %1451 = vmatpush1.msra.mxu0 0.0
    %1452 = vmatprep.subr.mxu0 0.0
    %1453 = vmatpush1.msra.mxu0 0.0
    %1454 = vmatprep.subr.mxu0 0.0
    %1455 = vmatpush1.msra.mxu0 0.0
    %1456 = vmatprep.subr.mxu0 0.0
    %1457 = vmatpush1.msra.mxu0 0.0
    %1458 = vmatprep.subr.mxu0 0.0
    %1459 = vmatpush1.msra.mxu0 0.0
    %1460 = vmatprep.subr.mxu0 0.0
    %1461 = vmatpush1.msra.mxu0 0.0
    %1462 = vmatprep.subr.mxu0 0.0
    %1463 = vmatpush1.msra.mxu0 0.0
    %1464 = vmatprep.subr.mxu0 0.0
    %1465 = vmatpush1.msra.mxu0 0.0
    %1466 = vmatprep.subr.mxu0 0.0
    %1467 = vmatpush1.msra.mxu0 0.0
    %1468 = vmatprep.subr.mxu0 0.0
    %1469 = vmatpush1.msra.mxu0 0.0
    %1470 = vmatprep.subr.mxu0 0.0
    %1471 = vmatpush1.msra.mxu0 0.0
    %1472 = vmatprep.subr.mxu0 0.0
    %1473 = vmatpush1.msra.mxu0 0.0
    %1474 = vmatprep.subr.mxu0 0.0
    %1475 = vmatpush1.msra.mxu0 0.0
    %1476 = vmatprep.subr.mxu0 0.0
    %1477 = vmatpush1.msra.mxu0 0.0
    %1478 = vmatprep.subr.mxu0 0.0
    %1479 = vmatpush1.msra.mxu0 0.0
    %1480 = vmatprep.subr.mxu0 0.0
    %1481 = vmatpush1.msra.mxu0 0.0
    %1482 = vmatprep.subr.mxu0 0.0
    %1483 = vmatpush1.msra.mxu0 0.0
    %1484 = vmatprep.subr.mxu0 0.0
    %1485 = vmatpush1.msra.mxu0 0.0
    %1486 = vmatprep.subr.mxu0 0.0
    %1487 = vmatpush1.msra.mxu0 0.0
    %1488 = vmatprep.subr.mxu0 0.0
    %1489 = vmatpush1.msra.mxu0 0.0
    %1490 = vmatprep.subr.mxu0 0.0
    %1491 = vmatpush1.msra.mxu0 0.0
    %1492 = vmatprep.subr.mxu0 0.0
    %1493 = vmatpush1.msra.mxu0 0.0
    %1494 = vmatprep.subr.mxu0 0.0
    %1495 = vmatpush1.msra.mxu0 0.0
    %1496 = vmatprep.subr.mxu0 0.0
    %1497 = vmatpush1.msra.mxu0 0.0
    %1498 = vmatprep.subr.mxu0 0.0
    %1499 = vmatpush1.msra.mxu0 0.0
    %1500 = vmatprep.subr.mxu0 0.0
    %1501 = vmatpush1.msra.mxu0 0.0
    %1502 = vmatprep.subr.mxu0 0.0
    %1503 = vmatpush1.msra.mxu0 0.0
    %1504 = vmatprep.mubr.f32.mxu0 0.0
    %1505 = vmatmul.mubr.f32.gmra.mrb[0].mxu0 %v1438
    %v1506 = vpop.f32.mrb[0].mxu0
    %v1507 = vadd.f32 0.0, %v1506
    %v1508 = vpop.f32.mrb[0].mxu0
    %1509 = vdwg.mxu0
    %1511 = vrot.lane.b32.xlu0 %v1426, 32
    %v1512 = vpop.permute.xlu0 %1511
    %v1513 = vsel %vm1315, %v1512, 0
    %1515 = vmatprep.subr.mxu0 0.0
    %1516 = vmatpush1.msra.mxu0 %v1427
    %1517 = vmatprep.subr.mxu0 0.0
    %1518 = vmatpush1.msra.mxu0 %v1428
    %1519 = vmatprep.subr.mxu0 0.0
    %1520 = vmatpush1.msra.mxu0 %v1429
    %1521 = vmatprep.subr.mxu0 0.0
    %1522 = vmatpush1.msra.mxu0 %v1430
    %1523 = vmatprep.subr.mxu0 0.0
    %1524 = vmatpush1.msra.mxu0 0.0
    %1525 = vmatprep.subr.mxu0 0.0
    %1526 = vmatpush1.msra.mxu0 0.0
    %1527 = vmatprep.subr.mxu0 0.0
    %1528 = vmatpush1.msra.mxu0 0.0
    %1529 = vmatprep.subr.mxu0 0.0
    %1530 = vmatpush1.msra.mxu0 0.0
    %1531 = vmatprep.subr.mxu0 0.0
    %1532 = vmatpush1.msra.mxu0 0.0
    %1533 = vmatprep.subr.mxu0 0.0
    %1534 = vmatpush1.msra.mxu0 0.0
    %1535 = vmatprep.subr.mxu0 0.0
    %1536 = vmatpush1.msra.mxu0 0.0
    %1537 = vmatprep.subr.mxu0 0.0
    %1538 = vmatpush1.msra.mxu0 0.0
    %1539 = vmatprep.subr.mxu0 0.0
    %1540 = vmatpush1.msra.mxu0 0.0
    %1541 = vmatprep.subr.mxu0 0.0
    %1542 = vmatpush1.msra.mxu0 0.0
    %1543 = vmatprep.subr.mxu0 0.0
    %1544 = vmatpush1.msra.mxu0 0.0
    %1545 = vmatprep.subr.mxu0 0.0
    %1546 = vmatpush1.msra.mxu0 0.0
    %1547 = vmatprep.subr.mxu0 0.0
    %1548 = vmatpush1.msra.mxu0 0.0
    %1549 = vmatprep.subr.mxu0 0.0
    %1550 = vmatpush1.msra.mxu0 0.0
    %1551 = vmatprep.subr.mxu0 0.0
    %1552 = vmatpush1.msra.mxu0 0.0
    %1553 = vmatprep.subr.mxu0 0.0
    %1554 = vmatpush1.msra.mxu0 0.0
    %1555 = vmatprep.subr.mxu0 0.0
    %1556 = vmatpush1.msra.mxu0 0.0
    %1557 = vmatprep.subr.mxu0 0.0
    %1558 = vmatpush1.msra.mxu0 0.0
    %1559 = vmatprep.subr.mxu0 0.0
    %1560 = vmatpush1.msra.mxu0 0.0
    %1561 = vmatprep.subr.mxu0 0.0
    %1562 = vmatpush1.msra.mxu0 0.0
    %1563 = vmatprep.subr.mxu0 0.0
    %1564 = vmatpush1.msra.mxu0 0.0
    %1565 = vmatprep.subr.mxu0 0.0
    %1566 = vmatpush1.msra.mxu0 0.0
    %1567 = vmatprep.subr.mxu0 0.0
    %1568 = vmatpush1.msra.mxu0 0.0
    %1569 = vmatprep.subr.mxu0 0.0
    %1570 = vmatpush1.msra.mxu0 0.0
    %1571 = vmatprep.subr.mxu0 0.0
    %1572 = vmatpush1.msra.mxu0 0.0
    %1573 = vmatprep.subr.mxu0 0.0
    %1574 = vmatpush1.msra.mxu0 0.0
    %1575 = vmatprep.subr.mxu0 0.0
    %1576 = vmatpush1.msra.mxu0 0.0
    %1577 = vmatprep.subr.mxu0 0.0
    %1578 = vmatpush1.msra.mxu0 0.0
    %1579 = vmatprep.mubr.f32.mxu0 0.0
    %1580 = vmatmul.mubr.f32.gmra.mrb[0].mxu0 %v1513
    %v1581 = vpop.f32.mrb[0].mxu0
    %v1582 = vadd.f32 %v1507, %v1581
    %v1583 = vpop.f32.mrb[0].mxu0
    %1584 = vdwg.mxu0
    %v1585 = vld [vmem:[%s14] sm:$0x1]
    %v1587 = vlaneseq
    %v1588 = vshrl.u32 %v1587, 7
    %v1589 = vsub.s32 0, %v1588
    %v1590 = vrot.slane %v1585, %v1589
    %v1592 = vadd.f32 %v1582, %v1590
    %s1593 = scalar_lea.vmem %s4, 2
    %v1594 = vld [vmem:[%s1593] sm:$0x3]
    %v1595 = vxor.u32 %v1592, 2147483648
    %v1596 = vmul.f32 %v1595, 1.442695
    %v1597 = vpow.pop %v1596
    %v1598 = vadd.f32 %v1597, 1.0
    %v1599 = vrcp.pop %v1598
    %v1600 = vmul.f32 1.0, %v1599
    %v1601 = vtanh.pop %v1592
    %1603 = vrot.lane.b32.xlu0 %v1594, 32
    %v1604 = vpop.permute.xlu0 %1603
    %v1606 = vmul.f32 %v1600, %v1604
    %1608 = vrot.lane.b32.xlu0 %v1601, 64
    %v1609 = vpop.permute.xlu0 %1608
    %v1611 = vmul.f32 %v1600, %v1609
    %1613 = vrot.lane.b32.xlu0 %v1611, 32
    %v1614 = vpop.permute.xlu0 %1613
    %v1616 = vadd.f32 %v1606, %v1614
    %v1617 = vtanh.pop %v1616
    %1619 = vrot.lane.b32.xlu0 %v1617, 64
    %v1620 = vpop.permute.xlu0 %1619
    %v1622 = vmul.f32 %v1600, %v1620
    %vm1624 = vcmask 254976
    %1625 = vst.msk [vmem:[#allocation14] sm:$0x3] %vm1624, %v1512
    %1627 = vrot.lane.b32.xlu0 %v1622, 32
    %v1628 = vpop.permute.xlu0 %1627
    %s1630 = scalar_lea.vmem [#allocation14], 2
    %1631 = vst.msk [vmem:[%s1630] sm:$0x3] %vm1624, %v1628
    %1633 = vrot.lane.b32.xlu0 %v1420, 96
    %v1634 = vpop.permute.xlu0 %1633
    %1636 = vst.msk [vmem:[#allocation16] sm:$0x3] %vm1624, %v1634
    %1638 = vrot.lane.b32.xlu0 %v1616, 96
    %v1639 = vpop.permute.xlu0 %1638
    %s1641 = scalar_lea.vmem [#allocation16], 2
    %1642 = vst.msk [vmem:[%s1641] sm:$0x3] %vm1624, %v1639
    %v1643 = vld [vmem:[#allocation11] sm:$0xff]
    %v1644 = vld [vmem:[#allocation11 + $0x8] sm:$0xff]
    %v1645 = vld [vmem:[#allocation11 + $0x10] sm:$0xff]
    %v1646 = vld [vmem:[#allocation11 + $0x18] sm:$0xff]
    %v1647 = vld [vmem:[%s16] sm:$0x1]
    %v1649 = vlaneseq
    %v1650 = vshrl.u32 %v1649, 7
    %v1651 = vsub.s32 0, %v1650
    %v1652 = vrot.slane %v1647, %v1651
    %v1654 = vsel %vm1315, %v1628, 0
    %1656 = vmatprep.subr.mxu0 0.0
    %1657 = vmatpush1.msra.mxu0 %v1643
    %1658 = vmatprep.subr.mxu0 0.0
    %1659 = vmatpush1.msra.mxu0 %v1644
    %1660 = vmatprep.subr.mxu0 0.0
    %1661 = vmatpush1.msra.mxu0 %v1645
    %1662 = vmatprep.subr.mxu0 0.0
    %1663 = vmatpush1.msra.mxu0 %v1646
    %1664 = vmatprep.subr.mxu0 0.0
    %1665 = vmatpush1.msra.mxu0 0.0
    %1666 = vmatprep.subr.mxu0 0.0
    %1667 = vmatpush1.msra.mxu0 0.0
    %1668 = vmatprep.subr.mxu0 0.0
    %1669 = vmatpush1.msra.mxu0 0.0
    %1670 = vmatprep.subr.mxu0 0.0
    %1671 = vmatpush1.msra.mxu0 0.0
    %1672 = vmatprep.subr.mxu0 0.0
    %1673 = vmatpush1.msra.mxu0 0.0
    %1674 = vmatprep.subr.mxu0 0.0
    %1675 = vmatpush1.msra.mxu0 0.0
    %1676 = vmatprep.subr.mxu0 0.0
    %1677 = vmatpush1.msra.mxu0 0.0
    %1678 = vmatprep.subr.mxu0 0.0
    %1679 = vmatpush1.msra.mxu0 0.0
    %1680 = vmatprep.subr.mxu0 0.0
    %1681 = vmatpush1.msra.mxu0 0.0
    %1682 = vmatprep.subr.mxu0 0.0
    %1683 = vmatpush1.msra.mxu0 0.0
    %1684 = vmatprep.subr.mxu0 0.0
    %1685 = vmatpush1.msra.mxu0 0.0
    %1686 = vmatprep.subr.mxu0 0.0
    %1687 = vmatpush1.msra.mxu0 0.0
    %1688 = vmatprep.subr.mxu0 0.0
    %1689 = vmatpush1.msra.mxu0 0.0
    %1690 = vmatprep.subr.mxu0 0.0
    %1691 = vmatpush1.msra.mxu0 0.0
    %1692 = vmatprep.subr.mxu0 0.0
    %1693 = vmatpush1.msra.mxu0 0.0
    %1694 = vmatprep.subr.mxu0 0.0
    %1695 = vmatpush1.msra.mxu0 0.0
    %1696 = vmatprep.subr.mxu0 0.0
    %1697 = vmatpush1.msra.mxu0 0.0
    %1698 = vmatprep.subr.mxu0 0.0
    %1699 = vmatpush1.msra.mxu0 0.0
    %1700 = vmatprep.subr.mxu0 0.0
    %1701 = vmatpush1.msra.mxu0 0.0
    %1702 = vmatprep.subr.mxu0 0.0
    %1703 = vmatpush1.msra.mxu0 0.0
    %1704 = vmatprep.subr.mxu0 0.0
    %1705 = vmatpush1.msra.mxu0 0.0
    %1706 = vmatprep.subr.mxu0 0.0
    %1707 = vmatpush1.msra.mxu0 0.0
    %1708 = vmatprep.subr.mxu0 0.0
    %1709 = vmatpush1.msra.mxu0 0.0
    %1710 = vmatprep.subr.mxu0 0.0
    %1711 = vmatpush1.msra.mxu0 0.0
    %1712 = vmatprep.subr.mxu0 0.0
    %1713 = vmatpush1.msra.mxu0 0.0
    %1714 = vmatprep.subr.mxu0 0.0
    %1715 = vmatpush1.msra.mxu0 0.0
    %1716 = vmatprep.subr.mxu0 0.0
    %1717 = vmatpush1.msra.mxu0 0.0
    %1718 = vmatprep.subr.mxu0 0.0
    %1719 = vmatpush1.msra.mxu0 0.0
    %1720 = vmatprep.mubr.f32.mxu0 0.0
    %1721 = vmatmul.mubr.f32.gmra.mrb[0].mxu0 %v1654
    %v1722 = vpop.f32.mrb[0].mxu0
    %v1723 = vadd.f32 %v1652, %v1722
    %v1724 = vpop.f32.mrb[0].mxu0
    %1725 = vdwg.mxu0
    %v1726 = vld [vmem:[%s5] sm:$0x3]
    %v1727 = vadd.f32 %v1723, %v1726
    %vm1728 = vcmask 1041408
    %v1729 = vsel %vm1728, %v1727, -inf
    %1730 = vmax.xlane.f32.xlu0 %v1729
    %v1731 = vpop.xlane.xlu0 %1730
    %v1732 = vsub.f32 %v1727, %v1731
    %v1733 = vmul.f32 %v1732, 1.442695
    %v1734 = vpow.pop %v1733
    %v1735 = vsel %vm1728, %v1734, 0.0
    %1736 = vadd.xlane.f32.xlu0 %v1735
    %v1737 = vpop.xlane.xlu0 %1736
    %v1738 = vrcp.pop %v1737
    %v1739 = vmul.f32 %v1734, %v1738
    %1740 = vst [vmem:[#allocation13] sm:$0x3] %v1739
    // Predicated region
    $region94: #{decoder_forward.1} parent=1 // pred_check
      _
    $region95: #{decoder_forward.1} parent=1 // pred_check_branch
      %1742 = sbr.rel (0) target = $region97
    $region96: #{decoder_forward.1} parent=1 // pred_region
      %s1744 = ssub.s32 32, 32
      %1745 = vsyncadd [#allocation4], %s1744
      %s1747 = sshll.u32 [#allocation13], 4
      %s1748 = int_to_ptr.vmem [resolvable:$true] %s1747
      %1750 = dma.vmem_to_hbm [thread:$0]  %s1748, 32, %s17, [#allocation4]
    $region97: #{decoder_forward.1} parent=1 // pred_fallthru
      _
    // Predicated region
    $region98: #{decoder_forward.1} parent=1 // pred_check
      _
    $region99: #{decoder_forward.1} parent=1 // pred_check_branch
      %1752 = sbr.rel (0) target = $region101
    $region100: #{decoder_forward.1} parent=1 // pred_region
      %s1754 = ssub.s32 64, 64
      %1755 = vsyncadd [#allocation15], %s1754
      %s1756 = sshll.u32 [#allocation14], 4
      %s1757 = int_to_ptr.vmem [resolvable:$true] %s1756
      %1762 = dma.vmem_to_hbm [thread:$0]  %s1757, 64, %s18, [#allocation15], 32, 32, 2
    $region101: #{decoder_forward.1} parent=1 // pred_fallthru
      _
    // Predicated region
    $region102: #{decoder_forward.1} parent=1 // pred_check
      _
    $region103: #{decoder_forward.1} parent=1 // pred_check_branch
      %1764 = sbr.rel (0) target = $region105
    $region104: #{decoder_forward.1} parent=1 // pred_region
      %s1766 = ssub.s32 64, 64
      %1767 = vsyncadd [#allocation15], %s1766
      %s1768 = sshll.u32 [#allocation16], 4
      %s1769 = int_to_ptr.vmem [resolvable:$true] %s1768
      %1774 = dma.vmem_to_hbm [thread:$0]  %s1769, 64, %s19, [#allocation15], 32, 32, 2
    $region105: #{decoder_forward.1} parent=1 // pred_fallthru
      _
    // Predicated region
    $region106: #{decoder_forward.1} parent=1 // pred_check
      _
    $region107: #{decoder_forward.1} parent=1 // pred_check_branch
      %1776 = sbr.rel (0) target = $region109
    $region108: #{decoder_forward.1} parent=1 // pred_region
      %1777 = dma.done [#allocation4], 32
    $region109: #{decoder_forward.1} parent=1 // pred_fallthru
      _
    // Predicated region
    $region110: #{decoder_forward.1} parent=1 // pred_check
      _
    $region111: #{decoder_forward.1} parent=1 // pred_check_branch
      %1779 = sbr.rel (0) target = $region113
    $region112: #{decoder_forward.1} parent=1 // pred_region
      %1780 = dma.done [#allocation15], 64
    $region113: #{decoder_forward.1} parent=1 // pred_fallthru
      _
    // Predicated region
    $region114: #{decoder_forward.1} parent=1 // pred_check
      _
    $region115: #{decoder_forward.1} parent=1 // pred_check_branch
      %1782 = sbr.rel (0) target = $region117
    $region116: #{decoder_forward.1} parent=1 // pred_region
      %1783 = dma.done [#allocation15], 64
    $region117: #{decoder_forward.1} parent=1 // pred_fallthru
      _
    %1784 = vsyncpa [#allocation3], 1
    %1785 = vsyncpa [#allocation6], 1
    %1786 = vsyncpa [#allocation9], 1
    %1787 = vsyncpa [#allocation12], 1
    %1788 = vsyncpa [#allocation4], 1
    %1789 = vsyncpa [#allocation15], 1

</llo_original>
